<compile_context>
chip_gen: v7x
topology: tpu7x:2x2x1
jax: 0.10.0
libtpu: 0.0.40
codegen_flags: <defaults>
</compile_context>

<pallas_src>
import jax
import jax.numpy as jnp
from jax import lax
from jax.experimental import pallas as pl
from jax.experimental.pallas import tpu as pltpu


def _round_up(x, m):
    return ((x + m - 1) // m) * m


def _vmem_tile_bytes(rows, cols, itemsize):
    """Physical VMEM footprint of a (rows, cols) buffer: layout pads the last
    dim to 128 lanes and the second-to-last dim to 8 sublanes."""
    return _round_up(max(rows, 1), 8) * _round_up(max(cols, 1), 128) * itemsize


def _vmem_limit_bytes():
    """Per-generation scoped-VMEM limit: ~3/4 of the per-core capacity
    (v5e/v6e 128 MiB -> 96 MiB, v7x 64 MiB -> 48 MiB), never the full VMEM."""
    try:
        cap = int(pltpu.get_tpu_info().vmem_capacity_bytes)
    except Exception:
        cap = 64 * 1024 * 1024  # conservative fallback (v7x per-TensorCore VMEM)
    return min((cap * 3) // 4, 100 * 1024 * 1024)


def _pick_row_tile(H, Wp, Cin, Cout, in_isize, out_isize, n_batch, batch_norm,
                   budget):
    """Largest divisor TH of H whose full per-step VMEM footprint (pipeline
    buffers + in-kernel temporaries) fits `budget`."""
    def footprint(th):
        m = th * Wp
        f = 0
        f += 2 * _vmem_tile_bytes(m, Cin, in_isize)           # main input (2 bufs)
        f += 2 * _vmem_tile_bytes(2 * Wp, Cin, in_isize)      # halo rows  (2 bufs)
        f += 2 * _vmem_tile_bytes(9 * Cin, Cout, in_isize)    # weights    (2 bufs)
        f += 2 * _vmem_tile_bytes(1, Cout, 4)                 # bias
        f += 2 * _vmem_tile_bytes(m, Cout, out_isize)         # output     (2 bufs)
        if batch_norm:
            f += 2 * _vmem_tile_bytes(2, Cout, 4)             # stats
        # in-kernel temporaries: assembled window, im2col LHS, f32 accumulator
        f += _vmem_tile_bytes(m + 2 * Wp + 8, Cin, in_isize)
        f += _vmem_tile_bytes(m, 9 * Cin, in_isize)
        f += 2 * _vmem_tile_bytes(m, Cout, 4)
        return f

    divisors = [d for d in range(1, H + 1) if H % d == 0]
    feasible = [d for d in divisors if footprint(d) <= budget]
    if not feasible:
        feasible = [1]
    # Megacore: keep >= 2 grid steps so both v7x TensorCores get work at N == 1.
    if n_batch == 1:
        multi = [d for d in feasible if H // d >= 2]
        if multi:
            return max(multi)
    return max(feasible)


# ----------------------------------------------------------------------------
# Kernel 1: 3x3 "same" conv (+ bias, + optional fused ReLU, + optional fused
# per-channel sum / sum-of-squares for BatchNorm statistics).
# One grid step = (batch element, row tile).  The tile's input window is the
# main (TH*Wp, Cin) block plus a 2-row halo block; for small Cin the 9 taps are
# folded into the contraction dim (one K = 9*Cin MXU pass per tile).
# ----------------------------------------------------------------------------
def _make_conv3x3_kernel(W, Wp, TH, Cin, Cout, apply_relu, emit_stats,
                         fold_taps):
    M = TH * Wp
    offs = [kh * Wp + kw for kh in range(3) for kw in range(3)]

    def kernel(x_ref, halo_ref, w_ref, b_ref, *out_refs):
        y_ref = out_refs[0]
        dt = x_ref.dtype
        # Window for this tile: TH*Wp main rows + 2*Wp halo rows + 8 zero rows
        # (the zero rows keep the taps feeding the 2 wrap-around output columns
        # of the last image row in bounds; those columns are discarded later).
        win = jnp.concatenate(
            [x_ref[...], halo_ref[...], jnp.zeros((8, Cin), dtype=dt)], axis=0)

        if fold_taps:
            # im2col: fold the 9 taps into K -> one matmul with K = 9*Cin
            # instead of 9 shallow K=Cin matmuls + 9 full-tile f32 VPU adds.
            lhs = jnp.concatenate([win[o:o + M, :] for o in offs], axis=-1)
            acc = jnp.dot(lhs, w_ref[...], preferred_element_type=jnp.float32)
        else:
            # Large Cin: per-tap matmuls are already MXU-deep; skip the im2col
            # copies (on v7x the MRB accumulates these in place).
            acc = jnp.dot(win[offs[0]:offs[0] + M, :], w_ref[0:Cin, :],
                          preferred_element_type=jnp.float32)
            for t in range(1, 9):
                o = offs[t]
                acc = acc + jnp.dot(win[o:o + M, :],
                                    w_ref[t * Cin:(t + 1) * Cin, :],
                                    preferred_element_type=jnp.float32)

        acc = acc + b_ref[...]                                   # (1, Cout) bias

        if emit_stats:
            stats_ref = out_refs[1]                              # (2, Cout)
            # Post-bias / pre-ReLU statistics from the f32 accumulator; the two
            # wrap-around columns of each image row are masked out.
            col = lax.broadcasted_iota(jnp.int32, (M, 1), 0) % Wp
            yv = jnp.where(col < W, acc, 0.0)
            stats_ref[0:1, :] = jnp.sum(yv, axis=0, keepdims=True)        # sum
            stats_ref[1:2, :] = jnp.sum(yv * acc, axis=0, keepdims=True)  # sumsq

        out = jnp.maximum(acc, 0.0) if apply_relu else acc
        y_ref[...] = out.astype(y_ref.dtype)

    return kernel


# ----------------------------------------------------------------------------
# Kernel 2: streamed BatchNorm apply (y * scale + shift) + ReLU, same tiling
# as the conv output.
# ----------------------------------------------------------------------------
def _bn_relu_apply_kernel(y_ref, scale_ref, shift_ref, o_ref):
    y = y_ref[...].astype(jnp.float32)
    o = y * scale_ref[...] + shift_ref[...]
    o_ref[...] = jnp.maximum(o, 0.0).astype(o_ref.dtype)


# ----------------------------------------------------------------------------
# Wrapper: ConvLayer.forward  (NCHW in / NCHW out, PyTorch semantics)
# ----------------------------------------------------------------------------
def conv_layer_forward(x_nchw, weight, bias, gamma, beta,
                       *, batch_norm=False, eps=1e-5):
    N, Cin, H, W = x_nchw.shape
    Cout = weight.shape[0]
    Wp = W + 2                                 # width + 1-px halo on each side
    act_dtype = x_nchw.dtype
    out_dtype = x_nchw.dtype
    conv_dtype = act_dtype                     # BN intermediate stays in act dtype
    in_isize = jnp.dtype(act_dtype).itemsize
    out_isize = jnp.dtype(out_dtype).itemsize

    vmem_limit = _vmem_limit_bytes()
    TH = _pick_row_tile(H, Wp, Cin, Cout, in_isize, out_isize, N, batch_norm,
                        budget=vmem_limit // 2)
    R = H // TH
    M = TH * Wp
    grid = (N, R)

    # --- input staging (XLA): NCHW -> NHWC, 1-px zero halo, row-flattened ----
    # TODO(synk): fold this transpose/pad into the pallas_call input side
    # (or expose an NHWC interface) to save one HBM round trip of the inputs.
    x_nhwc = jnp.transpose(x_nchw, (0, 2, 3, 1))
    x_pad = jnp.pad(x_nhwc, ((0, 0), (1, 1), (1, 1), (0, 0)))   # (N, H+2, Wp, Cin)
    # Non-overlapping main row blocks (padded rows [r*TH, r*TH+TH)) ...
    x_main = x_pad[:, :H].reshape(N, R, M, Cin)
    # ... plus a tiny gathered halo array (padded rows (r+1)*TH, (r+1)*TH+1),
    # so the kernel never needs the whole image resident in VMEM.
    hrow = (jnp.arange(1, R + 1) * TH)[:, None] + jnp.arange(2)[None, :]
    x_halo = x_pad[:, hrow.reshape(-1)].reshape(N, R, 2 * Wp, Cin)

    # --- parameters: (Cout, Cin, 3, 3) -> (9*Cin, Cout) in activation dtype ---
    w_r = jnp.transpose(weight, (2, 3, 1, 0)).reshape(9 * Cin, Cout)
    w_r = w_r.astype(act_dtype)
    b_r = bias.reshape(1, Cout).astype(jnp.float32)

    x_spec = pl.BlockSpec((None, None, M, Cin), lambda n, r: (n, r, 0, 0))
    halo_spec = pl.BlockSpec((None, None, 2 * Wp, Cin), lambda n, r: (n, r, 0, 0))
    # TODO(synk): w/b are grid-invariant; single-buffer them (pl.Buffered(1))
    # where supported — they are tiny here so double-buffering is harmless.
    w_spec = pl.BlockSpec((9 * Cin, Cout), lambda n, r: (0, 0))
    b_spec = pl.BlockSpec((1, Cout), lambda n, r: (0, 0))
    y_spec = pl.BlockSpec((None, None, M, Cout), lambda n, r: (n, r, 0, 0))

    compiler_params = pltpu.CompilerParams(
        dimension_semantics=("parallel", "parallel"),
        vmem_limit_bytes=vmem_limit)

    fold_taps = (9 * Cin) <= 256
    kernel = _make_conv3x3_kernel(W, Wp, TH, Cin, Cout,
                                  apply_relu=not batch_norm,
                                  emit_stats=batch_norm,
                                  fold_taps=fold_taps)

    y_shape = jax.ShapeDtypeStruct((N, R, M, Cout), conv_dtype)
    if batch_norm:
        out_shape = (y_shape,
                     jax.ShapeDtypeStruct((N, R, 2, Cout), jnp.float32))
        out_specs = (y_spec,
                     pl.BlockSpec((None, None, 2, Cout),
                                  lambda n, r: (n, r, 0, 0)))
    else:
        out_shape = y_shape
        out_specs = y_spec

    conv_out = pl.pallas_call(
        kernel,
        out_shape=out_shape,
        grid_spec=pltpu.PrefetchScalarGridSpec(
            num_scalar_prefetch=0,
            grid=grid,
            in_specs=[x_spec, halo_spec, w_spec, b_spec],
            out_specs=out_specs),
        compiler_params=compiler_params,
    )(x_main, x_halo, w_r, b_r)

    if batch_norm:
        y4, stats = conv_out
        # Finalize batch statistics (tiny (2, Cout) reduction in XLA).
        # TODO(synk): BatchNorm2d running_mean/running_var are not updated
        # (training-mode forward-output parity only).
        s = jnp.sum(stats, axis=(0, 1))
        count = jnp.float32(N * H * W)
        mean = s[0] / count
        var = jnp.maximum(s[1] / count - mean * mean, 0.0)    # biased variance
        scale = (gamma.astype(jnp.float32) * lax.rsqrt(var + eps)).reshape(1, Cout)
        shift = (beta.astype(jnp.float32) - mean * scale[0]).reshape(1, Cout)

        y4 = pl.pallas_call(
            _bn_relu_apply_kernel,
            out_shape=jax.ShapeDtypeStruct((N, R, M, Cout), out_dtype),
            grid_spec=pltpu.PrefetchScalarGridSpec(
                num_scalar_prefetch=0,
                grid=grid,
                in_specs=[y_spec,
                          pl.BlockSpec((1, Cout), lambda n, r: (0, 0)),
                          pl.BlockSpec((1, Cout), lambda n, r: (0, 0))],
                out_specs=y_spec),
            compiler_params=compiler_params,
        )(y4, scale, shift)
    else:
        y4 = conv_out

    # (N, R, TH*Wp, Cout) -> NCHW: drop the 2 wrap-around columns per image row
    # and transpose (single fused XLA copy of useful bytes only).
    y = y4.reshape(N, H, Wp, Cout)[:, :, :W, :]
    return jnp.transpose(y, (0, 3, 1, 2))


# ----------------------------------------------------------------------------
# Pure-JAX reference (correctness check only).
# ----------------------------------------------------------------------------
def conv_layer_reference(x_nchw, weight, bias, gamma, beta,
                         *, batch_norm=False, eps=1e-5):
    y = lax.conv_general_dilated(
        x_nchw, weight, window_strides=(1, 1), padding="SAME",
        dimension_numbers=("NCHW", "OIHW", "NCHW"))
    y = y + bias.reshape(1, -1, 1, 1)
    if batch_norm:
        mean = jnp.mean(y, axis=(0, 2, 3), keepdims=True)
        var = jnp.mean((y - mean) ** 2, axis=(0, 2, 3), keepdims=True)
        y = (y - mean) * lax.rsqrt(var + eps)
        y = y * gamma.reshape(1, -1, 1, 1) + beta.reshape(1, -1, 1, 1)
    return jnp.maximum(y, 0.0)


if __name__ == "__main__":
    N, Cin, H, W = 2, 4, 16, 16
    Cout = 8

    key = jax.random.PRNGKey(0)
    kw_, kb_, kx_ = jax.random.split(key, 3)

    weight = 0.1 * jax.random.normal(kw_, (Cout, Cin, 3, 3), jnp.float32)
    bias = 0.1 * jax.random.normal(kb_, (Cout,), jnp.float32)
    gamma = jnp.ones((Cout,), jnp.float32)   # BatchNorm2d weight init
    beta = jnp.zeros((Cout,), jnp.float32)   # BatchNorm2d bias init

    x = jax.random.normal(kx_, (N, Cin, H, W), jnp.float32)

    ok = True
    for do_bn in (False, True):
        out = conv_layer_forward(x, weight, bias, gamma, beta,
                                 batch_norm=do_bn)
        out = jax.block_until_ready(out)
        ref = conv_layer_reference(x, weight, bias, gamma, beta,
                                   batch_norm=do_bn)
        if not jnp.allclose(out, ref, atol=1e-4, rtol=1e-4):
            ok = False

    if ok:
        print("KERNEL_OK")
    else:
        print("KERNEL_MISMATCH")
</pallas_src>

<mosaic_0001>
module attributes {stable_mosaic.version = 11 : i64} {
  func.func @kernel(%arg0: i32, %arg1: i32, %arg2: memref<1x1x288x4xf32, #tpu.memory_space<vmem>>, %arg3: memref<1x1x36x4xf32, #tpu.memory_space<vmem>>, %arg4: memref<36x8xf32, #tpu.memory_space<vmem>>, %arg5: memref<1x8xf32, #tpu.memory_space<vmem>>, %arg6: memref<1x1x288x8xf32, #tpu.memory_space<vmem>>) attributes {dimension_semantics = [#tpu.dimension_semantics<parallel>, #tpu.dimension_semantics<parallel>], iteration_bounds = array<i64: 2, 1>, scalar_prefetch = 0 : i64, scratch_operands = 0 : i64, tpu.core_type = #tpu.core_type<tc>, window_params = [{transform_indices = @transform_0, window_bounds = array<i64: 1, 1, 288, 4>}, {transform_indices = @transform_1, window_bounds = array<i64: 1, 1, 36, 4>}, {pipeline_mode = #tpu.pipeline_mode<synchronous>, transform_indices = @transform_2, window_bounds = array<i64: 36, 8>}, {pipeline_mode = #tpu.pipeline_mode<synchronous>, transform_indices = @transform_3, window_bounds = array<i64: 1, 8>}, {transform_indices = @transform_4, window_bounds = array<i64: 1, 1, 288, 8>}]} {
    %c0 = arith.constant 0 : index
    %c0_0 = arith.constant 0 : index
    %c0_1 = arith.constant 0 : index
    %c0_2 = arith.constant 0 : index
    %0 = vector.load %arg2[%c0, %c0_0, %c0_1, %c0_2] : memref<1x1x288x4xf32, #tpu.memory_space<vmem>>, vector<1x1x288x4xf32>
    %1 = vector.shape_cast %0 : vector<1x1x288x4xf32> to vector<288x4xf32>
    %c0_3 = arith.constant 0 : index
    %c0_4 = arith.constant 0 : index
    %c0_5 = arith.constant 0 : index
    %c0_6 = arith.constant 0 : index
    %2 = vector.load %arg3[%c0_3, %c0_4, %c0_5, %c0_6] : memref<1x1x36x4xf32, #tpu.memory_space<vmem>>, vector<1x1x36x4xf32>
    %3 = vector.shape_cast %2 : vector<1x1x36x4xf32> to vector<36x4xf32>
    %cst = arith.constant 0.000000e+00 : f32
    %4 = vector.broadcast %cst : f32 to vector<8x4xf32>
    %5 = tpu.concatenate %1, %3, %4 in 0 : vector<288x4xf32>, vector<36x4xf32>, vector<8x4xf32> -> vector<332x4xf32>
    %6 = vector.extract_strided_slice %5 {offsets = [0, 0], sizes = [288, 4], strides = [1, 1]} : vector<332x4xf32> to vector<288x4xf32>
    %7 = vector.extract_strided_slice %5 {offsets = [1, 0], sizes = [288, 4], strides = [1, 1]} : vector<332x4xf32> to vector<288x4xf32>
    %8 = vector.extract_strided_slice %5 {offsets = [2, 0], sizes = [288, 4], strides = [1, 1]} : vector<332x4xf32> to vector<288x4xf32>
    %9 = vector.extract_strided_slice %5 {offsets = [18, 0], sizes = [288, 4], strides = [1, 1]} : vector<332x4xf32> to vector<288x4xf32>
    %10 = vector.extract_strided_slice %5 {offsets = [19, 0], sizes = [288, 4], strides = [1, 1]} : vector<332x4xf32> to vector<288x4xf32>
    %11 = vector.extract_strided_slice %5 {offsets = [20, 0], sizes = [288, 4], strides = [1, 1]} : vector<332x4xf32> to vector<288x4xf32>
    %12 = vector.extract_strided_slice %5 {offsets = [36, 0], sizes = [288, 4], strides = [1, 1]} : vector<332x4xf32> to vector<288x4xf32>
    %13 = vector.extract_strided_slice %5 {offsets = [37, 0], sizes = [288, 4], strides = [1, 1]} : vector<332x4xf32> to vector<288x4xf32>
    %14 = vector.extract_strided_slice %5 {offsets = [38, 0], sizes = [288, 4], strides = [1, 1]} : vector<332x4xf32> to vector<288x4xf32>
    %15 = tpu.concatenate %6, %7, %8, %9, %10, %11, %12, %13, %14 in 1 : vector<288x4xf32>, vector<288x4xf32>, vector<288x4xf32>, vector<288x4xf32>, vector<288x4xf32>, vector<288x4xf32>, vector<288x4xf32>, vector<288x4xf32>, vector<288x4xf32> -> vector<288x36xf32>
    %c0_7 = arith.constant 0 : index
    %c0_8 = arith.constant 0 : index
    %16 = vector.load %arg4[%c0_7, %c0_8] : memref<36x8xf32, #tpu.memory_space<vmem>>, vector<36x8xf32>
    %cst_9 = arith.constant dense<0.000000e+00> : vector<288x8xf32>
    %17 = tpu.matmul %15, %16, %cst_9 {dimension_numbers = #tpu.dot_dimension_numbers<[1], [0], [0], [1], [0, 0, 1, 1], [], []>} : vector<288x36xf32>, vector<36x8xf32>, vector<288x8xf32> -> vector<288x8xf32>
    %c0_10 = arith.constant 0 : index
    %c0_11 = arith.constant 0 : index
    %18 = vector.load %arg5[%c0_10, %c0_11] : memref<1x8xf32, #tpu.memory_space<vmem>>, vector<1x8xf32>
    %19 = vector.broadcast %18 : vector<1x8xf32> to vector<288x8xf32>
    %20 = arith.addf %17, %19 : vector<288x8xf32>
    %cst_12 = arith.constant 0.000000e+00 : f32
    %21 = vector.broadcast %cst_12 : f32 to vector<288x8xf32>
    %22 = arith.maximumf %20, %21 : vector<288x8xf32>
    %c0_13 = arith.constant 0 : index
    %c0_14 = arith.constant 0 : index
    %c0_15 = arith.constant 0 : index
    %c0_16 = arith.constant 0 : index
    %23 = vector.load %arg6[%c0_13, %c0_14, %c0_15, %c0_16] : memref<1x1x288x8xf32, #tpu.memory_space<vmem>>, vector<1x1x288x8xf32>
    %24 = vector.shape_cast %23 : vector<1x1x288x8xf32> to vector<288x8xf32>
    %25 = vector.shape_cast %22 : vector<288x8xf32> to vector<1x1x288x8xf32>
    tpu.vector_store %arg6[%c0_13, %c0_14, %c0_15, %c0_16], %25 {strides = array<i32>} : memref<1x1x288x8xf32, #tpu.memory_space<vmem>>, vector<1x1x288x8xf32>,
    return
  }
  func.func @transform_0(%arg0: i32, %arg1: i32) -> (i32, i32, i32, i32) {
    %c0_i32 = arith.constant 0 : i32
    %c0_i32_0 = arith.constant 0 : i32
    %c0_i32_1 = arith.constant 0 : i32
    return %arg0, %arg1, %c0_i32, %c0_i32_0 : i32, i32, i32, i32
  }
  func.func @transform_1(%arg0: i32, %arg1: i32) -> (i32, i32, i32, i32) {
    %c0_i32 = arith.constant 0 : i32
    %c0_i32_0 = arith.constant 0 : i32
    %c0_i32_1 = arith.constant 0 : i32
    return %arg0, %arg1, %c0_i32, %c0_i32_0 : i32, i32, i32, i32
  }
  func.func @transform_2(%arg0: i32, %arg1: i32) -> (i32, i32) {
    %c0_i32 = arith.constant 0 : i32
    %c0_i32_0 = arith.constant 0 : i32
    %c0_i32_1 = arith.constant 0 : i32
    return %c0_i32, %c0_i32_0 : i32, i32
  }
  func.func @transform_3(%arg0: i32, %arg1: i32) -> (i32, i32) {
    %c0_i32 = arith.constant 0 : i32
    %c0_i32_0 = arith.constant 0 : i32
    %c0_i32_1 = arith.constant 0 : i32
    return %c0_i32, %c0_i32_0 : i32, i32
  }
  func.func @transform_4(%arg0: i32, %arg1: i32) -> (i32, i32, i32, i32) {
    %c0_i32 = arith.constant 0 : i32
    %c0_i32_0 = arith.constant 0 : i32
    %c0_i32_1 = arith.constant 0 : i32
    return %arg0, %arg1, %c0_i32, %c0_i32_0 : i32, i32, i32, i32
  }
}

</mosaic_0001>

<llo_original>
// kernel: tpu_custom_call.1
$region0: #{tpu_custom_call.1}
  #allocation0 [shape = 'u32[]', space=smem, size = 0x4, offset = 0x4, fixed_abs, tag = 'smem constant byte address 0x4 - core index']
  #allocation1 [shape = 'u32[144,128]{1,0:T(1,128)}', space=vmem, size = 0x12000, scoped, tag = 'internal scratch']
  %s0 = inlined_call_operand.vmem [shape: f32[2,1,288,4], index: 0, kind: input, shape index: {}]
  %s1 = inlined_call_operand.vmem [shape: f32[2,1,36,4], index: 1, kind: input, shape index: {}]
  %s2 = inlined_call_operand.vmem [shape: f32[36,8], index: 2, kind: input, shape index: {}]
  %s3 = inlined_call_operand.vmem [shape: f32[1,8], index: 3, kind: input, shape index: {}]
  %s4 = inlined_call_operand.vmem [shape: f32[2,1,288,8], index: 4, kind: output, shape index: {}]
  %s5 = sld [smem:[#allocation0]]
  $region49: #{tpu_custom_call.1} parent=0
    _
  %s7 = ssub.s32 1, %s5
  %s8 = scalar_select 0, %s7, %s5
  loop: start=0, step=1, limit=4
  $region2: #{tpu_custom_call.1} parent=0 // loop_pre_header
    _
  $region3: #{tpu_custom_call.1} parent=0 // loop_header
    %s10 = sphi 0, %s14
    %p11 = scmp.ge.s32.totalorder %s10, 4
    %s17 = sphi 0, %s29
    %s18 = sphi 0, %s25
    %s19 = sphi 0, %s17
    %s20 = sphi 0, %s18
    %s21 = sphi 0, %s19
    %s22 = sphi 0, %s20
    %s34 = sphi 0, %s36
    %s37 = sphi 0, %s34
    %s38 = sphi 0, %s37
    %s54 = sphi 0, %s38
    %s62 = sphi 0, %s64
    %s65 = sphi 0, %s62
    %s66 = sphi 0, %s65
    %s82 = sphi 0, %s66
    %s86 = sphi 0, %s86
    %s88 = sphi 0, %s86
    %s89 = sphi 0, %s88
    %s103 = sphi 0, %s89
    %s107 = sphi 0, %s107
    %s109 = sphi 0, %s107
    %s110 = sphi 0, %s109
    %s124 = sphi 0, %s110
    %s132 = sphi 0, %s134
    %s135 = sphi 0, %s132
    %s136 = sphi 0, %s135
    %s152 = sphi 0, %s136
  $region4: #{tpu_custom_call.1} parent=0 // loop_header_branch
    %13 = sbr.rel (%p11) target = $region8
  $region5: #{tpu_custom_call.1} parent=0 // loop_body
    %s15 = ssub.s32 %s10, 1
    %s16 = ssub.s32 %s10, 2
    %s23 = sadd.s32 1, %s18
    %p24 = scmp.ge.s32.totalorder %s23, 1
    %s25 = scalar_select %p24, 0, %s23
    %s26 = sadd.s32 1, %s17
    %s27 = scalar_select %p24, %s26, %s17
    %p28 = scmp.ge.s32.totalorder %s27, 2
    %s29 = scalar_select %p28, 0, %s27
    %s30 = ssub.s32 %s17, %s29
    %s31 = ssub.s32 %s18, %s25
    %s32 = sor.u32 %s30, %s31
    %p33 = scmp.eq.s32.totalorder %s32, 0
    %s35 = sadd.s32 %s34, 1
    %s36 = scalar_select %p33, %s34, %s35
    %p39 = pneg %p33
    %p40 = scmp.eq.s32.totalorder %s10, 1
    %p41 = por %p39, %p40
    %p42 = scmp.ne.s32.totalorder %s34, %s37
    %p43 = scmp.eq.s32.totalorder %s10, 0
    %p44 = por %p42, %p43
    %p45 = scmp.ne.s32.totalorder %s34, %s37
    %p46 = scmp.eq.s32.totalorder %s15, 1
    %p47 = por %p45, %p46
    %p48 = scmp.ne.s32.totalorder %s37, %s38
    %p49 = scmp.eq.s32.totalorder %s15, 0
    %p50 = por %p48, %p49
    %p51 = scmp.ne.s32.totalorder %s37, %s38
    %p52 = scmp.eq.s32.totalorder %s16, 1
    %p53 = por %p51, %p52
    %p55 = scmp.ne.s32.totalorder %s38, %s54
    %p56 = scmp.eq.s32.totalorder %s16, 0
    %p57 = por %p55, %p56
    %s58 = ssub.s32 %s17, %s29
    %s59 = ssub.s32 %s18, %s25
    %s60 = sor.u32 %s58, %s59
    %p61 = scmp.eq.s32.totalorder %s60, 0
    %s63 = sadd.s32 %s62, 1
    %s64 = scalar_select %p61, %s62, %s63
    %p67 = pneg %p61
    %p68 = scmp.eq.s32.totalorder %s10, 1
    %p69 = por %p67, %p68
    %p70 = scmp.ne.s32.totalorder %s62, %s65
    %p71 = scmp.eq.s32.totalorder %s10, 0
    %p72 = por %p70, %p71
    %p73 = scmp.ne.s32.totalorder %s62, %s65
    %p74 = scmp.eq.s32.totalorder %s15, 1
    %p75 = por %p73, %p74
    %p76 = scmp.ne.s32.totalorder %s65, %s66
    %p77 = scmp.eq.s32.totalorder %s15, 0
    %p78 = por %p76, %p77
    %p79 = scmp.ne.s32.totalorder %s65, %s66
    %p80 = scmp.eq.s32.totalorder %s16, 1
    %p81 = por %p79, %p80
    %p83 = scmp.ne.s32.totalorder %s66, %s82
    %p84 = scmp.eq.s32.totalorder %s16, 0
    %p85 = por %p83, %p84
    %s87 = sadd.s32 %s86, 1
    %p90 = scmp.eq.s32.totalorder %s10, 1
    %p91 = scmp.ne.s32.totalorder %s86, %s88
    %p92 = scmp.eq.s32.totalorder %s10, 0
    %p93 = por %p91, %p92
    %p94 = scmp.ne.s32.totalorder %s86, %s88
    %p95 = scmp.eq.s32.totalorder %s15, 1
    %p96 = por %p94, %p95
    %p97 = scmp.ne.s32.totalorder %s88, %s89
    %p98 = scmp.eq.s32.totalorder %s15, 0
    %p99 = por %p97, %p98
    %p100 = scmp.ne.s32.totalorder %s88, %s89
    %p101 = scmp.eq.s32.totalorder %s16, 1
    %p102 = por %p100, %p101
    %p104 = scmp.ne.s32.totalorder %s89, %s103
    %p105 = scmp.eq.s32.totalorder %s16, 0
    %p106 = por %p104, %p105
    %s108 = sadd.s32 %s107, 1
    %p111 = scmp.eq.s32.totalorder %s10, 1
    %p112 = scmp.ne.s32.totalorder %s107, %s109
    %p113 = scmp.eq.s32.totalorder %s10, 0
    %p114 = por %p112, %p113
    %p115 = scmp.ne.s32.totalorder %s107, %s109
    %p116 = scmp.eq.s32.totalorder %s15, 1
    %p117 = por %p115, %p116
    %p118 = scmp.ne.s32.totalorder %s109, %s110
    %p119 = scmp.eq.s32.totalorder %s15, 0
    %p120 = por %p118, %p119
    %p121 = scmp.ne.s32.totalorder %s109, %s110
    %p122 = scmp.eq.s32.totalorder %s16, 1
    %p123 = por %p121, %p122
    %p125 = scmp.ne.s32.totalorder %s110, %s124
    %p126 = scmp.eq.s32.totalorder %s16, 0
    %p127 = por %p125, %p126
    %s128 = ssub.s32 %s17, %s29
    %s129 = ssub.s32 %s18, %s25
    %s130 = sor.u32 %s128, %s129
    %p131 = scmp.eq.s32.totalorder %s130, 0
    %s133 = sadd.s32 %s132, 1
    %s134 = scalar_select %p131, %s132, %s133
    %p137 = pneg %p131
    %p138 = scmp.eq.s32.totalorder %s10, 1
    %p139 = por %p137, %p138
    %p140 = scmp.ne.s32.totalorder %s132, %s135
    %p141 = scmp.eq.s32.totalorder %s10, 0
    %p142 = por %p140, %p141
    %p143 = scmp.ne.s32.totalorder %s132, %s135
    %p144 = scmp.eq.s32.totalorder %s15, 1
    %p145 = por %p143, %p144
    %p146 = scmp.ne.s32.totalorder %s135, %s136
    %p147 = scmp.eq.s32.totalorder %s15, 0
    %p148 = por %p146, %p147
    %p149 = scmp.ne.s32.totalorder %s135, %s136
    %p150 = scmp.eq.s32.totalorder %s16, 1
    %p151 = por %p149, %p150
    %p153 = scmp.ne.s32.totalorder %s136, %s152
    %p154 = scmp.eq.s32.totalorder %s16, 0
    %p155 = por %p153, %p154
    %p156 = scmp.le.s32.totalorder 1, %s10
    %p157 = scmp.lt.s32.totalorder %s10, 3
    %p158 = pnand %p156, %p157
    %p159 = pneg %p158
    // Predicated region
    $region9: #{tpu_custom_call.1} parent=5 // pred_check
      _
    $region10: #{tpu_custom_call.1} parent=5 // pred_check_branch
      %161 = sbr.rel (%p158) target = $region12
    $region11: #{tpu_custom_call.1} parent=5 // pred_region
      %s162 = ssub.s32 %s10, 1
      // Predicated region
      $region13: #{tpu_custom_call.1} parent=11 // pred_check
        %p163 = pneg %p99
      $region14: #{tpu_custom_call.1} parent=11 // pred_check_branch
        %165 = sbr.rel (%p163) target = $region16
      $region15: #{tpu_custom_call.1} parent=11 // pred_region
        _
      $region16: #{tpu_custom_call.1} parent=11 // pred_fallthru
        _
      // Predicated region
      $region17: #{tpu_custom_call.1} parent=11 // pred_check
        %p166 = pneg %p120
      $region18: #{tpu_custom_call.1} parent=11 // pred_check_branch
        %168 = sbr.rel (%p166) target = $region20
      $region19: #{tpu_custom_call.1} parent=11 // pred_region
        _
      $region20: #{tpu_custom_call.1} parent=11 // pred_fallthru
        _
    $region12: #{tpu_custom_call.1} parent=5 // pred_fallthru
      _
    %p169 = scmp.lt.s32.totalorder %s10, 2
    // Predicated region
    $region21: #{tpu_custom_call.1} parent=5 // pred_check
      %p170 = pneg %p169
    $region22: #{tpu_custom_call.1} parent=5 // pred_check_branch
      %172 = sbr.rel (%p170) target = $region24
    $region23: #{tpu_custom_call.1} parent=5 // pred_region
      // Predicated region
      $region25: #{tpu_custom_call.1} parent=23 // pred_check
        %p173 = pneg %p44
      $region26: #{tpu_custom_call.1} parent=23 // pred_check_branch
        %175 = sbr.rel (%p173) target = $region28
      $region27: #{tpu_custom_call.1} parent=23 // pred_region
        %p176 = scmp.lt.s32.totalorder %s17, 1
        %s177 = scalar_select %p176, %s17, 1
        %p178 = scmp.lt.s32.totalorder %s18, 0
        %s179 = scalar_select %p178, %s18, 0
        %s180 = smul.addr %s179, 36
        %s181 = smul.addr %s177, 36
        %s182 = sadd.s32 %s180, %s181
        %s183 = smul.addr %s182, 8
        %s184 = scalar_lea.vmem %s0, %s183
      $region28: #{tpu_custom_call.1} parent=23 // pred_fallthru
        _
      // Predicated region
      $region29: #{tpu_custom_call.1} parent=23 // pred_check
        %p185 = pneg %p72
      $region30: #{tpu_custom_call.1} parent=23 // pred_check_branch
        %187 = sbr.rel (%p185) target = $region32
      $region31: #{tpu_custom_call.1} parent=23 // pred_region
        %p188 = scmp.lt.s32.totalorder %s17, 1
        %s189 = scalar_select %p188, %s17, 1
        %p190 = scmp.lt.s32.totalorder %s18, 0
        %s191 = scalar_select %p190, %s18, 0
        %s192 = smul.addr %s191, 5
        %s193 = smul.addr %s189, 5
        %s194 = sadd.s32 %s192, %s193
        %s195 = smul.addr %s194, 8
        %s196 = scalar_lea.vmem %s1, %s195
      $region32: #{tpu_custom_call.1} parent=23 // pred_fallthru
        _
    $region24: #{tpu_custom_call.1} parent=5 // pred_fallthru
      _
    %p197 = scmp.le.s32.totalorder 1, %s10
    %p198 = scmp.lt.s32.totalorder %s10, 3
    %p199 = pnand %p197, %p198
    %p200 = pneg %p199
    // Predicated region
    $region33: #{tpu_custom_call.1} parent=5 // pred_check
      _
    $region34: #{tpu_custom_call.1} parent=5 // pred_check_branch
      %202 = sbr.rel (%p199) target = $region36
    $region35: #{tpu_custom_call.1} parent=5 // pred_region
      %s203 = ssub.s32 %s10, 1
      %p204 = scmp.lt.s32.totalorder %s19, 1
      %s205 = scalar_select %p204, %s19, 1
      %p206 = scmp.lt.s32.totalorder %s20, 0
      %s207 = scalar_select %p206, %s20, 0
      %s208 = smul.addr %s207, 36
      %s209 = smul.addr %s205, 36
      %s210 = sadd.s32 %s208, %s209
      %s211 = smul.addr %s210, 8
      %s212 = scalar_lea.vmem %s0, %s211
      %p213 = pneg %p50
      %p214 = pneg %p47
      %p215 = scmp.lt.s32.totalorder %s19, 1
      %s216 = scalar_select %p215, %s19, 1
      %p217 = scmp.lt.s32.totalorder %s20, 0
      %s218 = scalar_select %p217, %s20, 0
      %s219 = smul.addr %s218, 5
      %s220 = smul.addr %s216, 5
      %s221 = sadd.s32 %s219, %s220
      %s222 = smul.addr %s221, 8
      %s223 = scalar_lea.vmem %s1, %s222
      %p224 = pneg %p78
      %p225 = pneg %p75
      %p226 = pneg %p99
      %p227 = pneg %p96
      %p228 = pneg %p120
      %p229 = pneg %p117
      %p230 = pneg %p148
      %p231 = pneg %p145
      %p232 = scmp.lt.s32.totalorder %s19, 1
      %s233 = scalar_select %p232, %s19, 1
      %p234 = scmp.lt.s32.totalorder %s20, 0
      %s235 = scalar_select %p234, %s20, 0
      %s236 = smul.addr %s235, 36
      %s237 = smul.addr %s233, 36
      %s238 = sadd.s32 %s236, %s237
      %s239 = smul.addr %s238, 8
      %s240 = scalar_lea.vmem %s4, %s239
      %p241 = scmp.lt.s32.totalorder %s19, 1
      %s242 = scalar_select %p241, %s19, 1
      %p243 = scmp.lt.s32.totalorder %s20, 0
      %s244 = scalar_select %p243, %s20, 0
      %s245 = smul.addr %s244, 36
      %s246 = smul.addr %s242, 36
      %s247 = sadd.s32 %s245, %s246
      %s248 = smul.addr %s247, 8
      %s249 = scalar_lea.vmem %s0, %s248
      %p250 = scmp.lt.s32.totalorder %s19, 1
      %s251 = scalar_select %p250, %s19, 1
      %p252 = scmp.lt.s32.totalorder %s20, 0
      %s253 = scalar_select %p252, %s20, 0
      %s254 = smul.addr %s253, 5
      %s255 = smul.addr %s251, 5
      %s256 = sadd.s32 %s254, %s255
      %s257 = smul.addr %s256, 8
      %s258 = scalar_lea.vmem %s1, %s257
      %p259 = scmp.lt.s32.totalorder %s19, 1
      %s260 = scalar_select %p259, %s19, 1
      %p261 = scmp.lt.s32.totalorder %s20, 0
      %s262 = scalar_select %p261, %s20, 0
      %s263 = smul.addr %s262, 36
      %s264 = smul.addr %s260, 36
      %s265 = sadd.s32 %s263, %s264
      %s266 = smul.addr %s265, 8
      %s267 = scalar_lea.vmem %s4, %s266
      %v268 = vld [vmem:[%s249] sm:$0xff]
      %v269 = vld [vmem:[%s249 + $0x8] sm:$0xff]
      %v270 = vld [vmem:[%s249 + $0x10] sm:$0xff]
      %v271 = vld [vmem:[%s249 + $0x18] sm:$0xff]
      %v272 = vld [vmem:[%s249 + $0x20] sm:$0xff]
      %v273 = vld [vmem:[%s249 + $0x28] sm:$0xff]
      %v274 = vld [vmem:[%s249 + $0x30] sm:$0xff]
      %v275 = vld [vmem:[%s249 + $0x38] sm:$0xff]
      %v276 = vld [vmem:[%s249 + $0x40] sm:$0xff]
      %v277 = vld [vmem:[%s249 + $0x48] sm:$0xff]
      %v278 = vld [vmem:[%s249 + $0x50] sm:$0xff]
      %v279 = vld [vmem:[%s249 + $0x58] sm:$0xff]
      %v280 = vld [vmem:[%s249 + $0x60] sm:$0xff]
      %v281 = vld [vmem:[%s249 + $0x68] sm:$0xff]
      %v282 = vld [vmem:[%s249 + $0x70] sm:$0xff]
      %v283 = vld [vmem:[%s249 + $0x78] sm:$0xff]
      %v284 = vld [vmem:[%s249 + $0x80] sm:$0xff]
      %v285 = vld [vmem:[%s249 + $0x88] sm:$0xff]
      %v286 = vld [vmem:[%s249 + $0x90] sm:$0xff]
      %v287 = vld [vmem:[%s249 + $0x98] sm:$0xff]
      %v288 = vld [vmem:[%s249 + $0xa0] sm:$0xff]
      %v289 = vld [vmem:[%s249 + $0xa8] sm:$0xff]
      %v290 = vld [vmem:[%s249 + $0xb0] sm:$0xff]
      %v291 = vld [vmem:[%s249 + $0xb8] sm:$0xff]
      %v292 = vld [vmem:[%s249 + $0xc0] sm:$0xff]
      %v293 = vld [vmem:[%s249 + $0xc8] sm:$0xff]
      %v294 = vld [vmem:[%s249 + $0xd0] sm:$0xff]
      %v295 = vld [vmem:[%s249 + $0xd8] sm:$0xff]
      %v296 = vld [vmem:[%s249 + $0xe0] sm:$0xff]
      %v297 = vld [vmem:[%s249 + $0xe8] sm:$0xff]
      %v298 = vld [vmem:[%s249 + $0xf0] sm:$0xff]
      %v299 = vld [vmem:[%s249 + $0xf8] sm:$0xff]
      %v300 = vld [vmem:[%s249 + $0x100] sm:$0xff]
      %v301 = vld [vmem:[%s249 + $0x108] sm:$0xff]
      %v302 = vld [vmem:[%s249 + $0x110] sm:$0xff]
      %v303 = vld [vmem:[%s249 + $0x118] sm:$0xff]
      %v304 = vld [vmem:[%s258] sm:$0xff]
      %v305 = vld [vmem:[%s258 + $0x8] sm:$0xff]
      %v306 = vld [vmem:[%s258 + $0x10] sm:$0xff]
      %v307 = vld [vmem:[%s258 + $0x18] sm:$0xff]
      %v308 = vld [vmem:[%s258 + $0x20] sm:$0xf]
      %vm309 = vcmask 1043456
      %v310 = vsel %vm309, %v308, 0.0
      %vm348 = vcmask 1046528
      %v349 = vrot.slane %v268, 1
      %v350 = vrot.slane %v269, 1
      %v351 = vsel %vm348, %v349, %v350
      %v352 = vrot.slane %v270, 1
      %v353 = vsel %vm348, %v350, %v352
      %v354 = vrot.slane %v271, 1
      %v355 = vsel %vm348, %v352, %v354
      %v356 = vrot.slane %v272, 1
      %v357 = vsel %vm348, %v354, %v356
      %v358 = vrot.slane %v273, 1
      %v359 = vsel %vm348, %v356, %v358
      %v360 = vrot.slane %v274, 1
      %v361 = vsel %vm348, %v358, %v360
      %v362 = vrot.slane %v275, 1
      %v363 = vsel %vm348, %v360, %v362
      %v364 = vrot.slane %v276, 1
      %v365 = vsel %vm348, %v362, %v364
      %v366 = vrot.slane %v277, 1
      %v367 = vsel %vm348, %v364, %v366
      %v368 = vrot.slane %v278, 1
      %v369 = vsel %vm348, %v366, %v368
      %v370 = vrot.slane %v279, 1
      %v371 = vsel %vm348, %v368, %v370
      %v372 = vrot.slane %v280, 1
      %v373 = vsel %vm348, %v370, %v372
      %v374 = vrot.slane %v281, 1
      %v375 = vsel %vm348, %v372, %v374
      %v376 = vrot.slane %v282, 1
      %v377 = vsel %vm348, %v374, %v376
      %v378 = vrot.slane %v283, 1
      %v379 = vsel %vm348, %v376, %v378
      %v380 = vrot.slane %v284, 1
      %v381 = vsel %vm348, %v378, %v380
      %v382 = vrot.slane %v285, 1
      %v383 = vsel %vm348, %v380, %v382
      %v384 = vrot.slane %v286, 1
      %v385 = vsel %vm348, %v382, %v384
      %v386 = vrot.slane %v287, 1
      %v387 = vsel %vm348, %v384, %v386
      %v388 = vrot.slane %v288, 1
      %v389 = vsel %vm348, %v386, %v388
      %v390 = vrot.slane %v289, 1
      %v391 = vsel %vm348, %v388, %v390
      %v392 = vrot.slane %v290, 1
      %v393 = vsel %vm348, %v390, %v392
      %v394 = vrot.slane %v291, 1
      %v395 = vsel %vm348, %v392, %v394
      %v396 = vrot.slane %v292, 1
      %v397 = vsel %vm348, %v394, %v396
      %v398 = vrot.slane %v293, 1
      %v399 = vsel %vm348, %v396, %v398
      %v400 = vrot.slane %v294, 1
      %v401 = vsel %vm348, %v398, %v400
      %v402 = vrot.slane %v295, 1
      %v403 = vsel %vm348, %v400, %v402
      %v404 = vrot.slane %v296, 1
      %v405 = vsel %vm348, %v402, %v404
      %v406 = vrot.slane %v297, 1
      %v407 = vsel %vm348, %v404, %v406
      %v408 = vrot.slane %v298, 1
      %v409 = vsel %vm348, %v406, %v408
      %v410 = vrot.slane %v299, 1
      %v411 = vsel %vm348, %v408, %v410
      %v412 = vrot.slane %v300, 1
      %v413 = vsel %vm348, %v410, %v412
      %v414 = vrot.slane %v301, 1
      %v415 = vsel %vm348, %v412, %v414
      %v416 = vrot.slane %v302, 1
      %v417 = vsel %vm348, %v414, %v416
      %v418 = vrot.slane %v303, 1
      %v419 = vsel %vm348, %v416, %v418
      %v420 = vrot.slane %v304, 1
      %v421 = vsel %vm348, %v418, %v420
      %422 = vrot.lane.b32.xlu0 %v351, 4
      %v423 = vpop.permute.xlu0 %422
      %424 = vrot.lane.b32.xlu0 %v353, 4
      %v425 = vpop.permute.xlu0 %424
      %426 = vrot.lane.b32.xlu0 %v355, 4
      %v427 = vpop.permute.xlu0 %426
      %428 = vrot.lane.b32.xlu0 %v357, 4
      %v429 = vpop.permute.xlu0 %428
      %430 = vrot.lane.b32.xlu0 %v359, 4
      %v431 = vpop.permute.xlu0 %430
      %432 = vrot.lane.b32.xlu0 %v361, 4
      %v433 = vpop.permute.xlu0 %432
      %434 = vrot.lane.b32.xlu0 %v363, 4
      %v435 = vpop.permute.xlu0 %434
      %436 = vrot.lane.b32.xlu0 %v365, 4
      %v437 = vpop.permute.xlu0 %436
      %438 = vrot.lane.b32.xlu0 %v367, 4
      %v439 = vpop.permute.xlu0 %438
      %440 = vrot.lane.b32.xlu0 %v369, 4
      %v441 = vpop.permute.xlu0 %440
      %442 = vrot.lane.b32.xlu0 %v371, 4
      %v443 = vpop.permute.xlu0 %442
      %444 = vrot.lane.b32.xlu0 %v373, 4
      %v445 = vpop.permute.xlu0 %444
      %446 = vrot.lane.b32.xlu0 %v375, 4
      %v447 = vpop.permute.xlu0 %446
      %448 = vrot.lane.b32.xlu0 %v377, 4
      %v449 = vpop.permute.xlu0 %448
      %450 = vrot.lane.b32.xlu0 %v379, 4
      %v451 = vpop.permute.xlu0 %450
      %452 = vrot.lane.b32.xlu0 %v381, 4
      %v453 = vpop.permute.xlu0 %452
      %454 = vrot.lane.b32.xlu0 %v383, 4
      %v455 = vpop.permute.xlu0 %454
      %456 = vrot.lane.b32.xlu0 %v385, 4
      %v457 = vpop.permute.xlu0 %456
      %458 = vrot.lane.b32.xlu0 %v387, 4
      %v459 = vpop.permute.xlu0 %458
      %460 = vrot.lane.b32.xlu0 %v389, 4
      %v461 = vpop.permute.xlu0 %460
      %462 = vrot.lane.b32.xlu0 %v391, 4
      %v463 = vpop.permute.xlu0 %462
      %464 = vrot.lane.b32.xlu0 %v393, 4
      %v465 = vpop.permute.xlu0 %464
      %466 = vrot.lane.b32.xlu0 %v395, 4
      %v467 = vpop.permute.xlu0 %466
      %468 = vrot.lane.b32.xlu0 %v397, 4
      %v469 = vpop.permute.xlu0 %468
      %470 = vrot.lane.b32.xlu0 %v399, 4
      %v471 = vpop.permute.xlu0 %470
      %472 = vrot.lane.b32.xlu0 %v401, 4
      %v473 = vpop.permute.xlu0 %472
      %474 = vrot.lane.b32.xlu0 %v403, 4
      %v475 = vpop.permute.xlu0 %474
      %476 = vrot.lane.b32.xlu0 %v405, 4
      %v477 = vpop.permute.xlu0 %476
      %478 = vrot.lane.b32.xlu0 %v407, 4
      %v479 = vpop.permute.xlu0 %478
      %480 = vrot.lane.b32.xlu0 %v409, 4
      %v481 = vpop.permute.xlu0 %480
      %482 = vrot.lane.b32.xlu0 %v411, 4
      %v483 = vpop.permute.xlu0 %482
      %484 = vrot.lane.b32.xlu0 %v413, 4
      %v485 = vpop.permute.xlu0 %484
      %486 = vrot.lane.b32.xlu0 %v415, 4
      %v487 = vpop.permute.xlu0 %486
      %488 = vrot.lane.b32.xlu0 %v417, 4
      %v489 = vpop.permute.xlu0 %488
      %490 = vrot.lane.b32.xlu0 %v419, 4
      %v491 = vpop.permute.xlu0 %490
      %492 = vrot.lane.b32.xlu0 %v421, 4
      %v493 = vpop.permute.xlu0 %492
      %vm530 = vcmask 1045504
      %v531 = vrot.slane %v268, 2
      %v532 = vrot.slane %v269, 2
      %v533 = vsel %vm530, %v531, %v532
      %v534 = vrot.slane %v270, 2
      %v535 = vsel %vm530, %v532, %v534
      %v536 = vrot.slane %v271, 2
      %v537 = vsel %vm530, %v534, %v536
      %v538 = vrot.slane %v272, 2
      %v539 = vsel %vm530, %v536, %v538
      %v540 = vrot.slane %v273, 2
      %v541 = vsel %vm530, %v538, %v540
      %v542 = vrot.slane %v274, 2
      %v543 = vsel %vm530, %v540, %v542
      %v544 = vrot.slane %v275, 2
      %v545 = vsel %vm530, %v542, %v544
      %v546 = vrot.slane %v276, 2
      %v547 = vsel %vm530, %v544, %v546
      %v548 = vrot.slane %v277, 2
      %v549 = vsel %vm530, %v546, %v548
      %v550 = vrot.slane %v278, 2
      %v551 = vsel %vm530, %v548, %v550
      %v552 = vrot.slane %v279, 2
      %v553 = vsel %vm530, %v550, %v552
      %v554 = vrot.slane %v280, 2
      %v555 = vsel %vm530, %v552, %v554
      %v556 = vrot.slane %v281, 2
      %v557 = vsel %vm530, %v554, %v556
      %v558 = vrot.slane %v282, 2
      %v559 = vsel %vm530, %v556, %v558
      %v560 = vrot.slane %v283, 2
      %v561 = vsel %vm530, %v558, %v560
      %v562 = vrot.slane %v284, 2
      %v563 = vsel %vm530, %v560, %v562
      %v564 = vrot.slane %v285, 2
      %v565 = vsel %vm530, %v562, %v564
      %v566 = vrot.slane %v286, 2
      %v567 = vsel %vm530, %v564, %v566
      %v568 = vrot.slane %v287, 2
      %v569 = vsel %vm530, %v566, %v568
      %v570 = vrot.slane %v288, 2
      %v571 = vsel %vm530, %v568, %v570
      %v572 = vrot.slane %v289, 2
      %v573 = vsel %vm530, %v570, %v572
      %v574 = vrot.slane %v290, 2
      %v575 = vsel %vm530, %v572, %v574
      %v576 = vrot.slane %v291, 2
      %v577 = vsel %vm530, %v574, %v576
      %v578 = vrot.slane %v292, 2
      %v579 = vsel %vm530, %v576, %v578
      %v580 = vrot.slane %v293, 2
      %v581 = vsel %vm530, %v578, %v580
      %v582 = vrot.slane %v294, 2
      %v583 = vsel %vm530, %v580, %v582
      %v584 = vrot.slane %v295, 2
      %v585 = vsel %vm530, %v582, %v584
      %v586 = vrot.slane %v296, 2
      %v587 = vsel %vm530, %v584, %v586
      %v588 = vrot.slane %v297, 2
      %v589 = vsel %vm530, %v586, %v588
      %v590 = vrot.slane %v298, 2
      %v591 = vsel %vm530, %v588, %v590
      %v592 = vrot.slane %v299, 2
      %v593 = vsel %vm530, %v590, %v592
      %v594 = vrot.slane %v300, 2
      %v595 = vsel %vm530, %v592, %v594
      %v596 = vrot.slane %v301, 2
      %v597 = vsel %vm530, %v594, %v596
      %v598 = vrot.slane %v302, 2
      %v599 = vsel %vm530, %v596, %v598
      %v600 = vrot.slane %v303, 2
      %v601 = vsel %vm530, %v598, %v600
      %v602 = vrot.slane %v304, 2
      %v603 = vsel %vm530, %v600, %v602
      %604 = vrot.lane.b32.xlu0 %v533, 8
      %v605 = vpop.permute.xlu0 %604
      %606 = vrot.lane.b32.xlu0 %v535, 8
      %v607 = vpop.permute.xlu0 %606
      %608 = vrot.lane.b32.xlu0 %v537, 8
      %v609 = vpop.permute.xlu0 %608
      %610 = vrot.lane.b32.xlu0 %v539, 8
      %v611 = vpop.permute.xlu0 %610
      %612 = vrot.lane.b32.xlu0 %v541, 8
      %v613 = vpop.permute.xlu0 %612
      %614 = vrot.lane.b32.xlu0 %v543, 8
      %v615 = vpop.permute.xlu0 %614
      %616 = vrot.lane.b32.xlu0 %v545, 8
      %v617 = vpop.permute.xlu0 %616
      %618 = vrot.lane.b32.xlu0 %v547, 8
      %v619 = vpop.permute.xlu0 %618
      %620 = vrot.lane.b32.xlu0 %v549, 8
      %v621 = vpop.permute.xlu0 %620
      %622 = vrot.lane.b32.xlu0 %v551, 8
      %v623 = vpop.permute.xlu0 %622
      %624 = vrot.lane.b32.xlu0 %v553, 8
      %v625 = vpop.permute.xlu0 %624
      %626 = vrot.lane.b32.xlu0 %v555, 8
      %v627 = vpop.permute.xlu0 %626
      %628 = vrot.lane.b32.xlu0 %v557, 8
      %v629 = vpop.permute.xlu0 %628
      %630 = vrot.lane.b32.xlu0 %v559, 8
      %v631 = vpop.permute.xlu0 %630
      %632 = vrot.lane.b32.xlu0 %v561, 8
      %v633 = vpop.permute.xlu0 %632
      %634 = vrot.lane.b32.xlu0 %v563, 8
      %v635 = vpop.permute.xlu0 %634
      %636 = vrot.lane.b32.xlu0 %v565, 8
      %v637 = vpop.permute.xlu0 %636
      %638 = vrot.lane.b32.xlu0 %v567, 8
      %v639 = vpop.permute.xlu0 %638
      %640 = vrot.lane.b32.xlu0 %v569, 8
      %v641 = vpop.permute.xlu0 %640
      %642 = vrot.lane.b32.xlu0 %v571, 8
      %v643 = vpop.permute.xlu0 %642
      %644 = vrot.lane.b32.xlu0 %v573, 8
      %v645 = vpop.permute.xlu0 %644
      %646 = vrot.lane.b32.xlu0 %v575, 8
      %v647 = vpop.permute.xlu0 %646
      %648 = vrot.lane.b32.xlu0 %v577, 8
      %v649 = vpop.permute.xlu0 %648
      %650 = vrot.lane.b32.xlu0 %v579, 8
      %v651 = vpop.permute.xlu0 %650
      %652 = vrot.lane.b32.xlu0 %v581, 8
      %v653 = vpop.permute.xlu0 %652
      %654 = vrot.lane.b32.xlu0 %v583, 8
      %v655 = vpop.permute.xlu0 %654
      %656 = vrot.lane.b32.xlu0 %v585, 8
      %v657 = vpop.permute.xlu0 %656
      %658 = vrot.lane.b32.xlu0 %v587, 8
      %v659 = vpop.permute.xlu0 %658
      %660 = vrot.lane.b32.xlu0 %v589, 8
      %v661 = vpop.permute.xlu0 %660
      %662 = vrot.lane.b32.xlu0 %v591, 8
      %v663 = vpop.permute.xlu0 %662
      %664 = vrot.lane.b32.xlu0 %v593, 8
      %v665 = vpop.permute.xlu0 %664
      %666 = vrot.lane.b32.xlu0 %v595, 8
      %v667 = vpop.permute.xlu0 %666
      %668 = vrot.lane.b32.xlu0 %v597, 8
      %v669 = vpop.permute.xlu0 %668
      %670 = vrot.lane.b32.xlu0 %v599, 8
      %v671 = vpop.permute.xlu0 %670
      %672 = vrot.lane.b32.xlu0 %v601, 8
      %v673 = vpop.permute.xlu0 %672
      %674 = vrot.lane.b32.xlu0 %v603, 8
      %v675 = vpop.permute.xlu0 %674
      %v714 = vrot.slane %v305, 2
      %v715 = vsel %vm530, %v602, %v714
      %v716 = vrot.slane %v306, 2
      %v717 = vsel %vm530, %v714, %v716
      %718 = vrot.lane.b32.xlu0 %v537, 12
      %v719 = vpop.permute.xlu0 %718
      %720 = vrot.lane.b32.xlu0 %v539, 12
      %v721 = vpop.permute.xlu0 %720
      %722 = vrot.lane.b32.xlu0 %v541, 12
      %v723 = vpop.permute.xlu0 %722
      %724 = vrot.lane.b32.xlu0 %v543, 12
      %v725 = vpop.permute.xlu0 %724
      %726 = vrot.lane.b32.xlu0 %v545, 12
      %v727 = vpop.permute.xlu0 %726
      %728 = vrot.lane.b32.xlu0 %v547, 12
      %v729 = vpop.permute.xlu0 %728
      %730 = vrot.lane.b32.xlu0 %v549, 12
      %v731 = vpop.permute.xlu0 %730
      %732 = vrot.lane.b32.xlu0 %v551, 12
      %v733 = vpop.permute.xlu0 %732
      %734 = vrot.lane.b32.xlu0 %v553, 12
      %v735 = vpop.permute.xlu0 %734
      %736 = vrot.lane.b32.xlu0 %v555, 12
      %v737 = vpop.permute.xlu0 %736
      %738 = vrot.lane.b32.xlu0 %v557, 12
      %v739 = vpop.permute.xlu0 %738
      %740 = vrot.lane.b32.xlu0 %v559, 12
      %v741 = vpop.permute.xlu0 %740
      %742 = vrot.lane.b32.xlu0 %v561, 12
      %v743 = vpop.permute.xlu0 %742
      %744 = vrot.lane.b32.xlu0 %v563, 12
      %v745 = vpop.permute.xlu0 %744
      %746 = vrot.lane.b32.xlu0 %v565, 12
      %v747 = vpop.permute.xlu0 %746
      %748 = vrot.lane.b32.xlu0 %v567, 12
      %v749 = vpop.permute.xlu0 %748
      %750 = vrot.lane.b32.xlu0 %v569, 12
      %v751 = vpop.permute.xlu0 %750
      %752 = vrot.lane.b32.xlu0 %v571, 12
      %v753 = vpop.permute.xlu0 %752
      %754 = vrot.lane.b32.xlu0 %v573, 12
      %v755 = vpop.permute.xlu0 %754
      %756 = vrot.lane.b32.xlu0 %v575, 12
      %v757 = vpop.permute.xlu0 %756
      %758 = vrot.lane.b32.xlu0 %v577, 12
      %v759 = vpop.permute.xlu0 %758
      %760 = vrot.lane.b32.xlu0 %v579, 12
      %v761 = vpop.permute.xlu0 %760
      %762 = vrot.lane.b32.xlu0 %v581, 12
      %v763 = vpop.permute.xlu0 %762
      %764 = vrot.lane.b32.xlu0 %v583, 12
      %v765 = vpop.permute.xlu0 %764
      %766 = vrot.lane.b32.xlu0 %v585, 12
      %v767 = vpop.permute.xlu0 %766
      %768 = vrot.lane.b32.xlu0 %v587, 12
      %v769 = vpop.permute.xlu0 %768
      %770 = vrot.lane.b32.xlu0 %v589, 12
      %v771 = vpop.permute.xlu0 %770
      %772 = vrot.lane.b32.xlu0 %v591, 12
      %v773 = vpop.permute.xlu0 %772
      %774 = vrot.lane.b32.xlu0 %v593, 12
      %v775 = vpop.permute.xlu0 %774
      %776 = vrot.lane.b32.xlu0 %v595, 12
      %v777 = vpop.permute.xlu0 %776
      %778 = vrot.lane.b32.xlu0 %v597, 12
      %v779 = vpop.permute.xlu0 %778
      %780 = vrot.lane.b32.xlu0 %v599, 12
      %v781 = vpop.permute.xlu0 %780
      %782 = vrot.lane.b32.xlu0 %v601, 12
      %v783 = vpop.permute.xlu0 %782
      %784 = vrot.lane.b32.xlu0 %v603, 12
      %v785 = vpop.permute.xlu0 %784
      %786 = vrot.lane.b32.xlu0 %v715, 12
      %v787 = vpop.permute.xlu0 %786
      %788 = vrot.lane.b32.xlu0 %v717, 12
      %v789 = vpop.permute.xlu0 %788
      %vm826 = vcmask 1044480
      %v827 = vrot.slane %v270, 3
      %v828 = vrot.slane %v271, 3
      %v829 = vsel %vm826, %v827, %v828
      %v830 = vrot.slane %v272, 3
      %v831 = vsel %vm826, %v828, %v830
      %v832 = vrot.slane %v273, 3
      %v833 = vsel %vm826, %v830, %v832
      %v834 = vrot.slane %v274, 3
      %v835 = vsel %vm826, %v832, %v834
      %v836 = vrot.slane %v275, 3
      %v837 = vsel %vm826, %v834, %v836
      %v838 = vrot.slane %v276, 3
      %v839 = vsel %vm826, %v836, %v838
      %v840 = vrot.slane %v277, 3
      %v841 = vsel %vm826, %v838, %v840
      %v842 = vrot.slane %v278, 3
      %v843 = vsel %vm826, %v840, %v842
      %v844 = vrot.slane %v279, 3
      %v845 = vsel %vm826, %v842, %v844
      %v846 = vrot.slane %v280, 3
      %v847 = vsel %vm826, %v844, %v846
      %v848 = vrot.slane %v281, 3
      %v849 = vsel %vm826, %v846, %v848
      %v850 = vrot.slane %v282, 3
      %v851 = vsel %vm826, %v848, %v850
      %v852 = vrot.slane %v283, 3
      %v853 = vsel %vm826, %v850, %v852
      %v854 = vrot.slane %v284, 3
      %v855 = vsel %vm826, %v852, %v854
      %v856 = vrot.slane %v285, 3
      %v857 = vsel %vm826, %v854, %v856
      %v858 = vrot.slane %v286, 3
      %v859 = vsel %vm826, %v856, %v858
      %v860 = vrot.slane %v287, 3
      %v861 = vsel %vm826, %v858, %v860
      %v862 = vrot.slane %v288, 3
      %v863 = vsel %vm826, %v860, %v862
      %v864 = vrot.slane %v289, 3
      %v865 = vsel %vm826, %v862, %v864
      %v866 = vrot.slane %v290, 3
      %v867 = vsel %vm826, %v864, %v866
      %v868 = vrot.slane %v291, 3
      %v869 = vsel %vm826, %v866, %v868
      %v870 = vrot.slane %v292, 3
      %v871 = vsel %vm826, %v868, %v870
      %v872 = vrot.slane %v293, 3
      %v873 = vsel %vm826, %v870, %v872
      %v874 = vrot.slane %v294, 3
      %v875 = vsel %vm826, %v872, %v874
      %v876 = vrot.slane %v295, 3
      %v877 = vsel %vm826, %v874, %v876
      %v878 = vrot.slane %v296, 3
      %v879 = vsel %vm826, %v876, %v878
      %v880 = vrot.slane %v297, 3
      %v881 = vsel %vm826, %v878, %v880
      %v882 = vrot.slane %v298, 3
      %v883 = vsel %vm826, %v880, %v882
      %v884 = vrot.slane %v299, 3
      %v885 = vsel %vm826, %v882, %v884
      %v886 = vrot.slane %v300, 3
      %v887 = vsel %vm826, %v884, %v886
      %v888 = vrot.slane %v301, 3
      %v889 = vsel %vm826, %v886, %v888
      %v890 = vrot.slane %v302, 3
      %v891 = vsel %vm826, %v888, %v890
      %v892 = vrot.slane %v303, 3
      %v893 = vsel %vm826, %v890, %v892
      %v894 = vrot.slane %v304, 3
      %v895 = vsel %vm826, %v892, %v894
      %v896 = vrot.slane %v305, 3
      %v897 = vsel %vm826, %v894, %v896
      %v898 = vrot.slane %v306, 3
      %v899 = vsel %vm826, %v896, %v898
      %900 = vrot.lane.b32.xlu0 %v829, 16
      %v901 = vpop.permute.xlu0 %900
      %902 = vrot.lane.b32.xlu0 %v831, 16
      %v903 = vpop.permute.xlu0 %902
      %904 = vrot.lane.b32.xlu0 %v833, 16
      %v905 = vpop.permute.xlu0 %904
      %906 = vrot.lane.b32.xlu0 %v835, 16
      %v907 = vpop.permute.xlu0 %906
      %908 = vrot.lane.b32.xlu0 %v837, 16
      %v909 = vpop.permute.xlu0 %908
      %910 = vrot.lane.b32.xlu0 %v839, 16
      %v911 = vpop.permute.xlu0 %910
      %912 = vrot.lane.b32.xlu0 %v841, 16
      %v913 = vpop.permute.xlu0 %912
      %914 = vrot.lane.b32.xlu0 %v843, 16
      %v915 = vpop.permute.xlu0 %914
      %916 = vrot.lane.b32.xlu0 %v845, 16
      %v917 = vpop.permute.xlu0 %916
      %918 = vrot.lane.b32.xlu0 %v847, 16
      %v919 = vpop.permute.xlu0 %918
      %920 = vrot.lane.b32.xlu0 %v849, 16
      %v921 = vpop.permute.xlu0 %920
      %922 = vrot.lane.b32.xlu0 %v851, 16
      %v923 = vpop.permute.xlu0 %922
      %924 = vrot.lane.b32.xlu0 %v853, 16
      %v925 = vpop.permute.xlu0 %924
      %926 = vrot.lane.b32.xlu0 %v855, 16
      %v927 = vpop.permute.xlu0 %926
      %928 = vrot.lane.b32.xlu0 %v857, 16
      %v929 = vpop.permute.xlu0 %928
      %930 = vrot.lane.b32.xlu0 %v859, 16
      %v931 = vpop.permute.xlu0 %930
      %932 = vrot.lane.b32.xlu0 %v861, 16
      %v933 = vpop.permute.xlu0 %932
      %934 = vrot.lane.b32.xlu0 %v863, 16
      %v935 = vpop.permute.xlu0 %934
      %936 = vrot.lane.b32.xlu0 %v865, 16
      %v937 = vpop.permute.xlu0 %936
      %938 = vrot.lane.b32.xlu0 %v867, 16
      %v939 = vpop.permute.xlu0 %938
      %940 = vrot.lane.b32.xlu0 %v869, 16
      %v941 = vpop.permute.xlu0 %940
      %942 = vrot.lane.b32.xlu0 %v871, 16
      %v943 = vpop.permute.xlu0 %942
      %944 = vrot.lane.b32.xlu0 %v873, 16
      %v945 = vpop.permute.xlu0 %944
      %946 = vrot.lane.b32.xlu0 %v875, 16
      %v947 = vpop.permute.xlu0 %946
      %948 = vrot.lane.b32.xlu0 %v877, 16
      %v949 = vpop.permute.xlu0 %948
      %950 = vrot.lane.b32.xlu0 %v879, 16
      %v951 = vpop.permute.xlu0 %950
      %952 = vrot.lane.b32.xlu0 %v881, 16
      %v953 = vpop.permute.xlu0 %952
      %954 = vrot.lane.b32.xlu0 %v883, 16
      %v955 = vpop.permute.xlu0 %954
      %956 = vrot.lane.b32.xlu0 %v885, 16
      %v957 = vpop.permute.xlu0 %956
      %958 = vrot.lane.b32.xlu0 %v887, 16
      %v959 = vpop.permute.xlu0 %958
      %960 = vrot.lane.b32.xlu0 %v889, 16
      %v961 = vpop.permute.xlu0 %960
      %962 = vrot.lane.b32.xlu0 %v891, 16
      %v963 = vpop.permute.xlu0 %962
      %964 = vrot.lane.b32.xlu0 %v893, 16
      %v965 = vpop.permute.xlu0 %964
      %966 = vrot.lane.b32.xlu0 %v895, 16
      %v967 = vpop.permute.xlu0 %966
      %968 = vrot.lane.b32.xlu0 %v897, 16
      %v969 = vpop.permute.xlu0 %968
      %970 = vrot.lane.b32.xlu0 %v899, 16
      %v971 = vpop.permute.xlu0 %970
      %v1008 = vrot.slane %v270, 4
      %v1009 = vrot.slane %v271, 4
      %v1010 = vsel %vm309, %v1008, %v1009
      %v1011 = vrot.slane %v272, 4
      %v1012 = vsel %vm309, %v1009, %v1011
      %v1013 = vrot.slane %v273, 4
      %v1014 = vsel %vm309, %v1011, %v1013
      %v1015 = vrot.slane %v274, 4
      %v1016 = vsel %vm309, %v1013, %v1015
      %v1017 = vrot.slane %v275, 4
      %v1018 = vsel %vm309, %v1015, %v1017
      %v1019 = vrot.slane %v276, 4
      %v1020 = vsel %vm309, %v1017, %v1019
      %v1021 = vrot.slane %v277, 4
      %v1022 = vsel %vm309, %v1019, %v1021
      %v1023 = vrot.slane %v278, 4
      %v1024 = vsel %vm309, %v1021, %v1023
      %v1025 = vrot.slane %v279, 4
      %v1026 = vsel %vm309, %v1023, %v1025
      %v1027 = vrot.slane %v280, 4
      %v1028 = vsel %vm309, %v1025, %v1027
      %v1029 = vrot.slane %v281, 4
      %v1030 = vsel %vm309, %v1027, %v1029
      %v1031 = vrot.slane %v282, 4
      %v1032 = vsel %vm309, %v1029, %v1031
      %v1033 = vrot.slane %v283, 4
      %v1034 = vsel %vm309, %v1031, %v1033
      %v1035 = vrot.slane %v284, 4
      %v1036 = vsel %vm309, %v1033, %v1035
      %v1037 = vrot.slane %v285, 4
      %v1038 = vsel %vm309, %v1035, %v1037
      %v1039 = vrot.slane %v286, 4
      %v1040 = vsel %vm309, %v1037, %v1039
      %v1041 = vrot.slane %v287, 4
      %v1042 = vsel %vm309, %v1039, %v1041
      %v1043 = vrot.slane %v288, 4
      %v1044 = vsel %vm309, %v1041, %v1043
      %v1045 = vrot.slane %v289, 4
      %v1046 = vsel %vm309, %v1043, %v1045
      %v1047 = vrot.slane %v290, 4
      %v1048 = vsel %vm309, %v1045, %v1047
      %v1049 = vrot.slane %v291, 4
      %v1050 = vsel %vm309, %v1047, %v1049
      %v1051 = vrot.slane %v292, 4
      %v1052 = vsel %vm309, %v1049, %v1051
      %v1053 = vrot.slane %v293, 4
      %v1054 = vsel %vm309, %v1051, %v1053
      %v1055 = vrot.slane %v294, 4
      %v1056 = vsel %vm309, %v1053, %v1055
      %v1057 = vrot.slane %v295, 4
      %v1058 = vsel %vm309, %v1055, %v1057
      %v1059 = vrot.slane %v296, 4
      %v1060 = vsel %vm309, %v1057, %v1059
      %v1061 = vrot.slane %v297, 4
      %v1062 = vsel %vm309, %v1059, %v1061
      %v1063 = vrot.slane %v298, 4
      %v1064 = vsel %vm309, %v1061, %v1063
      %v1065 = vrot.slane %v299, 4
      %v1066 = vsel %vm309, %v1063, %v1065
      %v1067 = vrot.slane %v300, 4
      %v1068 = vsel %vm309, %v1065, %v1067
      %v1069 = vrot.slane %v301, 4
      %v1070 = vsel %vm309, %v1067, %v1069
      %v1071 = vrot.slane %v302, 4
      %v1072 = vsel %vm309, %v1069, %v1071
      %v1073 = vrot.slane %v303, 4
      %v1074 = vsel %vm309, %v1071, %v1073
      %v1075 = vrot.slane %v304, 4
      %v1076 = vsel %vm309, %v1073, %v1075
      %v1077 = vrot.slane %v305, 4
      %v1078 = vsel %vm309, %v1075, %v1077
      %v1079 = vrot.slane %v306, 4
      %v1080 = vsel %vm309, %v1077, %v1079
      %1081 = vrot.lane.b32.xlu0 %v1010, 20
      %v1082 = vpop.permute.xlu0 %1081
      %1083 = vrot.lane.b32.xlu0 %v1012, 20
      %v1084 = vpop.permute.xlu0 %1083
      %1085 = vrot.lane.b32.xlu0 %v1014, 20
      %v1086 = vpop.permute.xlu0 %1085
      %1087 = vrot.lane.b32.xlu0 %v1016, 20
      %v1088 = vpop.permute.xlu0 %1087
      %1089 = vrot.lane.b32.xlu0 %v1018, 20
      %v1090 = vpop.permute.xlu0 %1089
      %1091 = vrot.lane.b32.xlu0 %v1020, 20
      %v1092 = vpop.permute.xlu0 %1091
      %1093 = vrot.lane.b32.xlu0 %v1022, 20
      %v1094 = vpop.permute.xlu0 %1093
      %1095 = vrot.lane.b32.xlu0 %v1024, 20
      %v1096 = vpop.permute.xlu0 %1095
      %1097 = vrot.lane.b32.xlu0 %v1026, 20
      %v1098 = vpop.permute.xlu0 %1097
      %1099 = vrot.lane.b32.xlu0 %v1028, 20
      %v1100 = vpop.permute.xlu0 %1099
      %1101 = vrot.lane.b32.xlu0 %v1030, 20
      %v1102 = vpop.permute.xlu0 %1101
      %1103 = vrot.lane.b32.xlu0 %v1032, 20
      %v1104 = vpop.permute.xlu0 %1103
      %1105 = vrot.lane.b32.xlu0 %v1034, 20
      %v1106 = vpop.permute.xlu0 %1105
      %1107 = vrot.lane.b32.xlu0 %v1036, 20
      %v1108 = vpop.permute.xlu0 %1107
      %1109 = vrot.lane.b32.xlu0 %v1038, 20
      %v1110 = vpop.permute.xlu0 %1109
      %1111 = vrot.lane.b32.xlu0 %v1040, 20
      %v1112 = vpop.permute.xlu0 %1111
      %1113 = vrot.lane.b32.xlu0 %v1042, 20
      %v1114 = vpop.permute.xlu0 %1113
      %1115 = vrot.lane.b32.xlu0 %v1044, 20
      %v1116 = vpop.permute.xlu0 %1115
      %1117 = vrot.lane.b32.xlu0 %v1046, 20
      %v1118 = vpop.permute.xlu0 %1117
      %1119 = vrot.lane.b32.xlu0 %v1048, 20
      %v1120 = vpop.permute.xlu0 %1119
      %1121 = vrot.lane.b32.xlu0 %v1050, 20
      %v1122 = vpop.permute.xlu0 %1121
      %1123 = vrot.lane.b32.xlu0 %v1052, 20
      %v1124 = vpop.permute.xlu0 %1123
      %1125 = vrot.lane.b32.xlu0 %v1054, 20
      %v1126 = vpop.permute.xlu0 %1125
      %1127 = vrot.lane.b32.xlu0 %v1056, 20
      %v1128 = vpop.permute.xlu0 %1127
      %1129 = vrot.lane.b32.xlu0 %v1058, 20
      %v1130 = vpop.permute.xlu0 %1129
      %1131 = vrot.lane.b32.xlu0 %v1060, 20
      %v1132 = vpop.permute.xlu0 %1131
      %1133 = vrot.lane.b32.xlu0 %v1062, 20
      %v1134 = vpop.permute.xlu0 %1133
      %1135 = vrot.lane.b32.xlu0 %v1064, 20
      %v1136 = vpop.permute.xlu0 %1135
      %1137 = vrot.lane.b32.xlu0 %v1066, 20
      %v1138 = vpop.permute.xlu0 %1137
      %1139 = vrot.lane.b32.xlu0 %v1068, 20
      %v1140 = vpop.permute.xlu0 %1139
      %1141 = vrot.lane.b32.xlu0 %v1070, 20
      %v1142 = vpop.permute.xlu0 %1141
      %1143 = vrot.lane.b32.xlu0 %v1072, 20
      %v1144 = vpop.permute.xlu0 %1143
      %1145 = vrot.lane.b32.xlu0 %v1074, 20
      %v1146 = vpop.permute.xlu0 %1145
      %1147 = vrot.lane.b32.xlu0 %v1076, 20
      %v1148 = vpop.permute.xlu0 %1147
      %1149 = vrot.lane.b32.xlu0 %v1078, 20
      %v1150 = vpop.permute.xlu0 %1149
      %1151 = vrot.lane.b32.xlu0 %v1080, 20
      %v1152 = vpop.permute.xlu0 %1151
      %v1191 = vrot.slane %v307, 4
      %v1192 = vsel %vm309, %v1079, %v1191
      %v1193 = vrot.slane %v310, 4
      %v1194 = vsel %vm309, %v1191, %v1193
      %1195 = vrot.lane.b32.xlu0 %v1014, 24
      %v1196 = vpop.permute.xlu0 %1195
      %1197 = vrot.lane.b32.xlu0 %v1016, 24
      %v1198 = vpop.permute.xlu0 %1197
      %1199 = vrot.lane.b32.xlu0 %v1018, 24
      %v1200 = vpop.permute.xlu0 %1199
      %1201 = vrot.lane.b32.xlu0 %v1020, 24
      %v1202 = vpop.permute.xlu0 %1201
      %1203 = vrot.lane.b32.xlu0 %v1022, 24
      %v1204 = vpop.permute.xlu0 %1203
      %1205 = vrot.lane.b32.xlu0 %v1024, 24
      %v1206 = vpop.permute.xlu0 %1205
      %1207 = vrot.lane.b32.xlu0 %v1026, 24
      %v1208 = vpop.permute.xlu0 %1207
      %1209 = vrot.lane.b32.xlu0 %v1028, 24
      %v1210 = vpop.permute.xlu0 %1209
      %1211 = vrot.lane.b32.xlu0 %v1030, 24
      %v1212 = vpop.permute.xlu0 %1211
      %1213 = vrot.lane.b32.xlu0 %v1032, 24
      %v1214 = vpop.permute.xlu0 %1213
      %1215 = vrot.lane.b32.xlu0 %v1034, 24
      %v1216 = vpop.permute.xlu0 %1215
      %1217 = vrot.lane.b32.xlu0 %v1036, 24
      %v1218 = vpop.permute.xlu0 %1217
      %1219 = vrot.lane.b32.xlu0 %v1038, 24
      %v1220 = vpop.permute.xlu0 %1219
      %1221 = vrot.lane.b32.xlu0 %v1040, 24
      %v1222 = vpop.permute.xlu0 %1221
      %1223 = vrot.lane.b32.xlu0 %v1042, 24
      %v1224 = vpop.permute.xlu0 %1223
      %1225 = vrot.lane.b32.xlu0 %v1044, 24
      %v1226 = vpop.permute.xlu0 %1225
      %1227 = vrot.lane.b32.xlu0 %v1046, 24
      %v1228 = vpop.permute.xlu0 %1227
      %1229 = vrot.lane.b32.xlu0 %v1048, 24
      %v1230 = vpop.permute.xlu0 %1229
      %1231 = vrot.lane.b32.xlu0 %v1050, 24
      %v1232 = vpop.permute.xlu0 %1231
      %1233 = vrot.lane.b32.xlu0 %v1052, 24
      %v1234 = vpop.permute.xlu0 %1233
      %1235 = vrot.lane.b32.xlu0 %v1054, 24
      %v1236 = vpop.permute.xlu0 %1235
      %1237 = vrot.lane.b32.xlu0 %v1056, 24
      %v1238 = vpop.permute.xlu0 %1237
      %1239 = vrot.lane.b32.xlu0 %v1058, 24
      %v1240 = vpop.permute.xlu0 %1239
      %1241 = vrot.lane.b32.xlu0 %v1060, 24
      %v1242 = vpop.permute.xlu0 %1241
      %1243 = vrot.lane.b32.xlu0 %v1062, 24
      %v1244 = vpop.permute.xlu0 %1243
      %1245 = vrot.lane.b32.xlu0 %v1064, 24
      %v1246 = vpop.permute.xlu0 %1245
      %1247 = vrot.lane.b32.xlu0 %v1066, 24
      %v1248 = vpop.permute.xlu0 %1247
      %1249 = vrot.lane.b32.xlu0 %v1068, 24
      %v1250 = vpop.permute.xlu0 %1249
      %1251 = vrot.lane.b32.xlu0 %v1070, 24
      %v1252 = vpop.permute.xlu0 %1251
      %1253 = vrot.lane.b32.xlu0 %v1072, 24
      %v1254 = vpop.permute.xlu0 %1253
      %1255 = vrot.lane.b32.xlu0 %v1074, 24
      %v1256 = vpop.permute.xlu0 %1255
      %1257 = vrot.lane.b32.xlu0 %v1076, 24
      %v1258 = vpop.permute.xlu0 %1257
      %1259 = vrot.lane.b32.xlu0 %v1078, 24
      %v1260 = vpop.permute.xlu0 %1259
      %1261 = vrot.lane.b32.xlu0 %v1080, 24
      %v1262 = vpop.permute.xlu0 %1261
      %1263 = vrot.lane.b32.xlu0 %v1192, 24
      %v1264 = vpop.permute.xlu0 %1263
      %1265 = vrot.lane.b32.xlu0 %v1194, 24
      %v1266 = vpop.permute.xlu0 %1265
      %vm1303 = vcmask 1042432
      %v1304 = vrot.slane %v272, 5
      %v1305 = vrot.slane %v273, 5
      %v1306 = vsel %vm1303, %v1304, %v1305
      %v1307 = vrot.slane %v274, 5
      %v1308 = vsel %vm1303, %v1305, %v1307
      %v1309 = vrot.slane %v275, 5
      %v1310 = vsel %vm1303, %v1307, %v1309
      %v1311 = vrot.slane %v276, 5
      %v1312 = vsel %vm1303, %v1309, %v1311
      %v1313 = vrot.slane %v277, 5
      %v1314 = vsel %vm1303, %v1311, %v1313
      %v1315 = vrot.slane %v278, 5
      %v1316 = vsel %vm1303, %v1313, %v1315
      %v1317 = vrot.slane %v279, 5
      %v1318 = vsel %vm1303, %v1315, %v1317
      %v1319 = vrot.slane %v280, 5
      %v1320 = vsel %vm1303, %v1317, %v1319
      %v1321 = vrot.slane %v281, 5
      %v1322 = vsel %vm1303, %v1319, %v1321
      %v1323 = vrot.slane %v282, 5
      %v1324 = vsel %vm1303, %v1321, %v1323
      %v1325 = vrot.slane %v283, 5
      %v1326 = vsel %vm1303, %v1323, %v1325
      %v1327 = vrot.slane %v284, 5
      %v1328 = vsel %vm1303, %v1325, %v1327
      %v1329 = vrot.slane %v285, 5
      %v1330 = vsel %vm1303, %v1327, %v1329
      %v1331 = vrot.slane %v286, 5
      %v1332 = vsel %vm1303, %v1329, %v1331
      %v1333 = vrot.slane %v287, 5
      %v1334 = vsel %vm1303, %v1331, %v1333
      %v1335 = vrot.slane %v288, 5
      %v1336 = vsel %vm1303, %v1333, %v1335
      %v1337 = vrot.slane %v289, 5
      %v1338 = vsel %vm1303, %v1335, %v1337
      %v1339 = vrot.slane %v290, 5
      %v1340 = vsel %vm1303, %v1337, %v1339
      %v1341 = vrot.slane %v291, 5
      %v1342 = vsel %vm1303, %v1339, %v1341
      %v1343 = vrot.slane %v292, 5
      %v1344 = vsel %vm1303, %v1341, %v1343
      %v1345 = vrot.slane %v293, 5
      %v1346 = vsel %vm1303, %v1343, %v1345
      %v1347 = vrot.slane %v294, 5
      %v1348 = vsel %vm1303, %v1345, %v1347
      %v1349 = vrot.slane %v295, 5
      %v1350 = vsel %vm1303, %v1347, %v1349
      %v1351 = vrot.slane %v296, 5
      %v1352 = vsel %vm1303, %v1349, %v1351
      %v1353 = vrot.slane %v297, 5
      %v1354 = vsel %vm1303, %v1351, %v1353
      %v1355 = vrot.slane %v298, 5
      %v1356 = vsel %vm1303, %v1353, %v1355
      %v1357 = vrot.slane %v299, 5
      %v1358 = vsel %vm1303, %v1355, %v1357
      %v1359 = vrot.slane %v300, 5
      %v1360 = vsel %vm1303, %v1357, %v1359
      %v1361 = vrot.slane %v301, 5
      %v1362 = vsel %vm1303, %v1359, %v1361
      %v1363 = vrot.slane %v302, 5
      %v1364 = vsel %vm1303, %v1361, %v1363
      %v1365 = vrot.slane %v303, 5
      %v1366 = vsel %vm1303, %v1363, %v1365
      %v1367 = vrot.slane %v304, 5
      %v1368 = vsel %vm1303, %v1365, %v1367
      %v1369 = vrot.slane %v305, 5
      %v1370 = vsel %vm1303, %v1367, %v1369
      %v1371 = vrot.slane %v306, 5
      %v1372 = vsel %vm1303, %v1369, %v1371
      %v1373 = vrot.slane %v307, 5
      %v1374 = vsel %vm1303, %v1371, %v1373
      %v1375 = vrot.slane %v310, 5
      %v1376 = vsel %vm1303, %v1373, %v1375
      %1377 = vrot.lane.b32.xlu0 %v1306, 28
      %v1378 = vpop.permute.xlu0 %1377
      %1379 = vrot.lane.b32.xlu0 %v1308, 28
      %v1380 = vpop.permute.xlu0 %1379
      %1381 = vrot.lane.b32.xlu0 %v1310, 28
      %v1382 = vpop.permute.xlu0 %1381
      %1383 = vrot.lane.b32.xlu0 %v1312, 28
      %v1384 = vpop.permute.xlu0 %1383
      %1385 = vrot.lane.b32.xlu0 %v1314, 28
      %v1386 = vpop.permute.xlu0 %1385
      %1387 = vrot.lane.b32.xlu0 %v1316, 28
      %v1388 = vpop.permute.xlu0 %1387
      %1389 = vrot.lane.b32.xlu0 %v1318, 28
      %v1390 = vpop.permute.xlu0 %1389
      %1391 = vrot.lane.b32.xlu0 %v1320, 28
      %v1392 = vpop.permute.xlu0 %1391
      %1393 = vrot.lane.b32.xlu0 %v1322, 28
      %v1394 = vpop.permute.xlu0 %1393
      %1395 = vrot.lane.b32.xlu0 %v1324, 28
      %v1396 = vpop.permute.xlu0 %1395
      %1397 = vrot.lane.b32.xlu0 %v1326, 28
      %v1398 = vpop.permute.xlu0 %1397
      %1399 = vrot.lane.b32.xlu0 %v1328, 28
      %v1400 = vpop.permute.xlu0 %1399
      %1401 = vrot.lane.b32.xlu0 %v1330, 28
      %v1402 = vpop.permute.xlu0 %1401
      %1403 = vrot.lane.b32.xlu0 %v1332, 28
      %v1404 = vpop.permute.xlu0 %1403
      %1405 = vrot.lane.b32.xlu0 %v1334, 28
      %v1406 = vpop.permute.xlu0 %1405
      %1407 = vrot.lane.b32.xlu0 %v1336, 28
      %v1408 = vpop.permute.xlu0 %1407
      %1409 = vrot.lane.b32.xlu0 %v1338, 28
      %v1410 = vpop.permute.xlu0 %1409
      %1411 = vrot.lane.b32.xlu0 %v1340, 28
      %v1412 = vpop.permute.xlu0 %1411
      %1413 = vrot.lane.b32.xlu0 %v1342, 28
      %v1414 = vpop.permute.xlu0 %1413
      %1415 = vrot.lane.b32.xlu0 %v1344, 28
      %v1416 = vpop.permute.xlu0 %1415
      %1417 = vrot.lane.b32.xlu0 %v1346, 28
      %v1418 = vpop.permute.xlu0 %1417
      %1419 = vrot.lane.b32.xlu0 %v1348, 28
      %v1420 = vpop.permute.xlu0 %1419
      %1421 = vrot.lane.b32.xlu0 %v1350, 28
      %v1422 = vpop.permute.xlu0 %1421
      %1423 = vrot.lane.b32.xlu0 %v1352, 28
      %v1424 = vpop.permute.xlu0 %1423
      %1425 = vrot.lane.b32.xlu0 %v1354, 28
      %v1426 = vpop.permute.xlu0 %1425
      %1427 = vrot.lane.b32.xlu0 %v1356, 28
      %v1428 = vpop.permute.xlu0 %1427
      %1429 = vrot.lane.b32.xlu0 %v1358, 28
      %v1430 = vpop.permute.xlu0 %1429
      %1431 = vrot.lane.b32.xlu0 %v1360, 28
      %v1432 = vpop.permute.xlu0 %1431
      %1433 = vrot.lane.b32.xlu0 %v1362, 28
      %v1434 = vpop.permute.xlu0 %1433
      %1435 = vrot.lane.b32.xlu0 %v1364, 28
      %v1436 = vpop.permute.xlu0 %1435
      %1437 = vrot.lane.b32.xlu0 %v1366, 28
      %v1438 = vpop.permute.xlu0 %1437
      %1439 = vrot.lane.b32.xlu0 %v1368, 28
      %v1440 = vpop.permute.xlu0 %1439
      %1441 = vrot.lane.b32.xlu0 %v1370, 28
      %v1442 = vpop.permute.xlu0 %1441
      %1443 = vrot.lane.b32.xlu0 %v1372, 28
      %v1444 = vpop.permute.xlu0 %1443
      %1445 = vrot.lane.b32.xlu0 %v1374, 28
      %v1446 = vpop.permute.xlu0 %1445
      %1447 = vrot.lane.b32.xlu0 %v1376, 28
      %v1448 = vpop.permute.xlu0 %1447
      %vm1485 = vcmask 1041408
      %v1486 = vrot.slane %v272, 6
      %v1487 = vrot.slane %v273, 6
      %v1488 = vsel %vm1485, %v1486, %v1487
      %v1489 = vrot.slane %v274, 6
      %v1490 = vsel %vm1485, %v1487, %v1489
      %v1491 = vrot.slane %v275, 6
      %v1492 = vsel %vm1485, %v1489, %v1491
      %v1493 = vrot.slane %v276, 6
      %v1494 = vsel %vm1485, %v1491, %v1493
      %v1495 = vrot.slane %v277, 6
      %v1496 = vsel %vm1485, %v1493, %v1495
      %v1497 = vrot.slane %v278, 6
      %v1498 = vsel %vm1485, %v1495, %v1497
      %v1499 = vrot.slane %v279, 6
      %v1500 = vsel %vm1485, %v1497, %v1499
      %v1501 = vrot.slane %v280, 6
      %v1502 = vsel %vm1485, %v1499, %v1501
      %v1503 = vrot.slane %v281, 6
      %v1504 = vsel %vm1485, %v1501, %v1503
      %v1505 = vrot.slane %v282, 6
      %v1506 = vsel %vm1485, %v1503, %v1505
      %v1507 = vrot.slane %v283, 6
      %v1508 = vsel %vm1485, %v1505, %v1507
      %v1509 = vrot.slane %v284, 6
      %v1510 = vsel %vm1485, %v1507, %v1509
      %v1511 = vrot.slane %v285, 6
      %v1512 = vsel %vm1485, %v1509, %v1511
      %v1513 = vrot.slane %v286, 6
      %v1514 = vsel %vm1485, %v1511, %v1513
      %v1515 = vrot.slane %v287, 6
      %v1516 = vsel %vm1485, %v1513, %v1515
      %v1517 = vrot.slane %v288, 6
      %v1518 = vsel %vm1485, %v1515, %v1517
      %v1519 = vrot.slane %v289, 6
      %v1520 = vsel %vm1485, %v1517, %v1519
      %v1521 = vrot.slane %v290, 6
      %v1522 = vsel %vm1485, %v1519, %v1521
      %v1523 = vrot.slane %v291, 6
      %v1524 = vsel %vm1485, %v1521, %v1523
      %v1525 = vrot.slane %v292, 6
      %v1526 = vsel %vm1485, %v1523, %v1525
      %v1527 = vrot.slane %v293, 6
      %v1528 = vsel %vm1485, %v1525, %v1527
      %v1529 = vrot.slane %v294, 6
      %v1530 = vsel %vm1485, %v1527, %v1529
      %v1531 = vrot.slane %v295, 6
      %v1532 = vsel %vm1485, %v1529, %v1531
      %v1533 = vrot.slane %v296, 6
      %v1534 = vsel %vm1485, %v1531, %v1533
      %v1535 = vrot.slane %v297, 6
      %v1536 = vsel %vm1485, %v1533, %v1535
      %v1537 = vrot.slane %v298, 6
      %v1538 = vsel %vm1485, %v1535, %v1537
      %v1539 = vrot.slane %v299, 6
      %v1540 = vsel %vm1485, %v1537, %v1539
      %v1541 = vrot.slane %v300, 6
      %v1542 = vsel %vm1485, %v1539, %v1541
      %v1543 = vrot.slane %v301, 6
      %v1544 = vsel %vm1485, %v1541, %v1543
      %v1545 = vrot.slane %v302, 6
      %v1546 = vsel %vm1485, %v1543, %v1545
      %v1547 = vrot.slane %v303, 6
      %v1548 = vsel %vm1485, %v1545, %v1547
      %v1549 = vrot.slane %v304, 6
      %v1550 = vsel %vm1485, %v1547, %v1549
      %v1551 = vrot.slane %v305, 6
      %v1552 = vsel %vm1485, %v1549, %v1551
      %v1553 = vrot.slane %v306, 6
      %v1554 = vsel %vm1485, %v1551, %v1553
      %v1555 = vrot.slane %v307, 6
      %v1556 = vsel %vm1485, %v1553, %v1555
      %v1557 = vrot.slane %v310, 6
      %v1558 = vsel %vm1485, %v1555, %v1557
      %1559 = vrot.lane.b32.xlu0 %v1488, 32
      %v1560 = vpop.permute.xlu0 %1559
      %1561 = vrot.lane.b32.xlu0 %v1490, 32
      %v1562 = vpop.permute.xlu0 %1561
      %1563 = vrot.lane.b32.xlu0 %v1492, 32
      %v1564 = vpop.permute.xlu0 %1563
      %1565 = vrot.lane.b32.xlu0 %v1494, 32
      %v1566 = vpop.permute.xlu0 %1565
      %1567 = vrot.lane.b32.xlu0 %v1496, 32
      %v1568 = vpop.permute.xlu0 %1567
      %1569 = vrot.lane.b32.xlu0 %v1498, 32
      %v1570 = vpop.permute.xlu0 %1569
      %1571 = vrot.lane.b32.xlu0 %v1500, 32
      %v1572 = vpop.permute.xlu0 %1571
      %1573 = vrot.lane.b32.xlu0 %v1502, 32
      %v1574 = vpop.permute.xlu0 %1573
      %1575 = vrot.lane.b32.xlu0 %v1504, 32
      %v1576 = vpop.permute.xlu0 %1575
      %1577 = vrot.lane.b32.xlu0 %v1506, 32
      %v1578 = vpop.permute.xlu0 %1577
      %1579 = vrot.lane.b32.xlu0 %v1508, 32
      %v1580 = vpop.permute.xlu0 %1579
      %1581 = vrot.lane.b32.xlu0 %v1510, 32
      %v1582 = vpop.permute.xlu0 %1581
      %1583 = vrot.lane.b32.xlu0 %v1512, 32
      %v1584 = vpop.permute.xlu0 %1583
      %1585 = vrot.lane.b32.xlu0 %v1514, 32
      %v1586 = vpop.permute.xlu0 %1585
      %1587 = vrot.lane.b32.xlu0 %v1516, 32
      %v1588 = vpop.permute.xlu0 %1587
      %1589 = vrot.lane.b32.xlu0 %v1518, 32
      %v1590 = vpop.permute.xlu0 %1589
      %1591 = vrot.lane.b32.xlu0 %v1520, 32
      %v1592 = vpop.permute.xlu0 %1591
      %1593 = vrot.lane.b32.xlu0 %v1522, 32
      %v1594 = vpop.permute.xlu0 %1593
      %1595 = vrot.lane.b32.xlu0 %v1524, 32
      %v1596 = vpop.permute.xlu0 %1595
      %1597 = vrot.lane.b32.xlu0 %v1526, 32
      %v1598 = vpop.permute.xlu0 %1597
      %1599 = vrot.lane.b32.xlu0 %v1528, 32
      %v1600 = vpop.permute.xlu0 %1599
      %1601 = vrot.lane.b32.xlu0 %v1530, 32
      %v1602 = vpop.permute.xlu0 %1601
      %1603 = vrot.lane.b32.xlu0 %v1532, 32
      %v1604 = vpop.permute.xlu0 %1603
      %1605 = vrot.lane.b32.xlu0 %v1534, 32
      %v1606 = vpop.permute.xlu0 %1605
      %1607 = vrot.lane.b32.xlu0 %v1536, 32
      %v1608 = vpop.permute.xlu0 %1607
      %1609 = vrot.lane.b32.xlu0 %v1538, 32
      %v1610 = vpop.permute.xlu0 %1609
      %1611 = vrot.lane.b32.xlu0 %v1540, 32
      %v1612 = vpop.permute.xlu0 %1611
      %1613 = vrot.lane.b32.xlu0 %v1542, 32
      %v1614 = vpop.permute.xlu0 %1613
      %1615 = vrot.lane.b32.xlu0 %v1544, 32
      %v1616 = vpop.permute.xlu0 %1615
      %1617 = vrot.lane.b32.xlu0 %v1546, 32
      %v1618 = vpop.permute.xlu0 %1617
      %1619 = vrot.lane.b32.xlu0 %v1548, 32
      %v1620 = vpop.permute.xlu0 %1619
      %1621 = vrot.lane.b32.xlu0 %v1550, 32
      %v1622 = vpop.permute.xlu0 %1621
      %1623 = vrot.lane.b32.xlu0 %v1552, 32
      %v1624 = vpop.permute.xlu0 %1623
      %1625 = vrot.lane.b32.xlu0 %v1554, 32
      %v1626 = vpop.permute.xlu0 %1625
      %1627 = vrot.lane.b32.xlu0 %v1556, 32
      %v1628 = vpop.permute.xlu0 %1627
      %1629 = vrot.lane.b32.xlu0 %v1558, 32
      %v1630 = vpop.permute.xlu0 %1629
      %vm1667 = vcmask 31744
      %v1668 = vsel %vm1667, %v268, %v423
      %v1669 = vsel %vm1667, %v269, %v425
      %v1670 = vsel %vm1667, %v270, %v427
      %v1671 = vsel %vm1667, %v271, %v429
      %v1672 = vsel %vm1667, %v272, %v431
      %v1673 = vsel %vm1667, %v273, %v433
      %v1674 = vsel %vm1667, %v274, %v435
      %v1675 = vsel %vm1667, %v275, %v437
      %v1676 = vsel %vm1667, %v276, %v439
      %v1677 = vsel %vm1667, %v277, %v441
      %v1678 = vsel %vm1667, %v278, %v443
      %v1679 = vsel %vm1667, %v279, %v445
      %v1680 = vsel %vm1667, %v280, %v447
      %v1681 = vsel %vm1667, %v281, %v449
      %v1682 = vsel %vm1667, %v282, %v451
      %v1683 = vsel %vm1667, %v283, %v453
      %v1684 = vsel %vm1667, %v284, %v455
      %v1685 = vsel %vm1667, %v285, %v457
      %v1686 = vsel %vm1667, %v286, %v459
      %v1687 = vsel %vm1667, %v287, %v461
      %v1688 = vsel %vm1667, %v288, %v463
      %v1689 = vsel %vm1667, %v289, %v465
      %v1690 = vsel %vm1667, %v290, %v467
      %v1691 = vsel %vm1667, %v291, %v469
      %v1692 = vsel %vm1667, %v292, %v471
      %v1693 = vsel %vm1667, %v293, %v473
      %v1694 = vsel %vm1667, %v294, %v475
      %v1695 = vsel %vm1667, %v295, %v477
      %v1696 = vsel %vm1667, %v296, %v479
      %v1697 = vsel %vm1667, %v297, %v481
      %v1698 = vsel %vm1667, %v298, %v483
      %v1699 = vsel %vm1667, %v299, %v485
      %v1700 = vsel %vm1667, %v300, %v487
      %v1701 = vsel %vm1667, %v301, %v489
      %v1702 = vsel %vm1667, %v302, %v491
      %v1703 = vsel %vm1667, %v303, %v493
      %vm1704 = vcmask 64512
      %v1705 = vsel %vm1704, %v1668, %v605
      %v1706 = vsel %vm1704, %v1669, %v607
      %v1707 = vsel %vm1704, %v1670, %v609
      %v1708 = vsel %vm1704, %v1671, %v611
      %v1709 = vsel %vm1704, %v1672, %v613
      %v1710 = vsel %vm1704, %v1673, %v615
      %v1711 = vsel %vm1704, %v1674, %v617
      %v1712 = vsel %vm1704, %v1675, %v619
      %v1713 = vsel %vm1704, %v1676, %v621
      %v1714 = vsel %vm1704, %v1677, %v623
      %v1715 = vsel %vm1704, %v1678, %v625
      %v1716 = vsel %vm1704, %v1679, %v627
      %v1717 = vsel %vm1704, %v1680, %v629
      %v1718 = vsel %vm1704, %v1681, %v631
      %v1719 = vsel %vm1704, %v1682, %v633
      %v1720 = vsel %vm1704, %v1683, %v635
      %v1721 = vsel %vm1704, %v1684, %v637
      %v1722 = vsel %vm1704, %v1685, %v639
      %v1723 = vsel %vm1704, %v1686, %v641
      %v1724 = vsel %vm1704, %v1687, %v643
      %v1725 = vsel %vm1704, %v1688, %v645
      %v1726 = vsel %vm1704, %v1689, %v647
      %v1727 = vsel %vm1704, %v1690, %v649
      %v1728 = vsel %vm1704, %v1691, %v651
      %v1729 = vsel %vm1704, %v1692, %v653
      %v1730 = vsel %vm1704, %v1693, %v655
      %v1731 = vsel %vm1704, %v1694, %v657
      %v1732 = vsel %vm1704, %v1695, %v659
      %v1733 = vsel %vm1704, %v1696, %v661
      %v1734 = vsel %vm1704, %v1697, %v663
      %v1735 = vsel %vm1704, %v1698, %v665
      %v1736 = vsel %vm1704, %v1699, %v667
      %v1737 = vsel %vm1704, %v1700, %v669
      %v1738 = vsel %vm1704, %v1701, %v671
      %v1739 = vsel %vm1704, %v1702, %v673
      %v1740 = vsel %vm1704, %v1703, %v675
      %vm1741 = vcmask 97280
      %v1742 = vsel %vm1741, %v1705, %v719
      %v1743 = vsel %vm1741, %v1706, %v721
      %v1744 = vsel %vm1741, %v1707, %v723
      %v1745 = vsel %vm1741, %v1708, %v725
      %v1746 = vsel %vm1741, %v1709, %v727
      %v1747 = vsel %vm1741, %v1710, %v729
      %v1748 = vsel %vm1741, %v1711, %v731
      %v1749 = vsel %vm1741, %v1712, %v733
      %v1750 = vsel %vm1741, %v1713, %v735
      %v1751 = vsel %vm1741, %v1714, %v737
      %v1752 = vsel %vm1741, %v1715, %v739
      %v1753 = vsel %vm1741, %v1716, %v741
      %v1754 = vsel %vm1741, %v1717, %v743
      %v1755 = vsel %vm1741, %v1718, %v745
      %v1756 = vsel %vm1741, %v1719, %v747
      %v1757 = vsel %vm1741, %v1720, %v749
      %v1758 = vsel %vm1741, %v1721, %v751
      %v1759 = vsel %vm1741, %v1722, %v753
      %v1760 = vsel %vm1741, %v1723, %v755
      %v1761 = vsel %vm1741, %v1724, %v757
      %v1762 = vsel %vm1741, %v1725, %v759
      %v1763 = vsel %vm1741, %v1726, %v761
      %v1764 = vsel %vm1741, %v1727, %v763
      %v1765 = vsel %vm1741, %v1728, %v765
      %v1766 = vsel %vm1741, %v1729, %v767
      %v1767 = vsel %vm1741, %v1730, %v769
      %v1768 = vsel %vm1741, %v1731, %v771
      %v1769 = vsel %vm1741, %v1732, %v773
      %v1770 = vsel %vm1741, %v1733, %v775
      %v1771 = vsel %vm1741, %v1734, %v777
      %v1772 = vsel %vm1741, %v1735, %v779
      %v1773 = vsel %vm1741, %v1736, %v781
      %v1774 = vsel %vm1741, %v1737, %v783
      %v1775 = vsel %vm1741, %v1738, %v785
      %v1776 = vsel %vm1741, %v1739, %v787
      %v1777 = vsel %vm1741, %v1740, %v789
      %vm1778 = vcmask 130048
      %v1779 = vsel %vm1778, %v1742, %v901
      %v1780 = vsel %vm1778, %v1743, %v903
      %v1781 = vsel %vm1778, %v1744, %v905
      %v1782 = vsel %vm1778, %v1745, %v907
      %v1783 = vsel %vm1778, %v1746, %v909
      %v1784 = vsel %vm1778, %v1747, %v911
      %v1785 = vsel %vm1778, %v1748, %v913
      %v1786 = vsel %vm1778, %v1749, %v915
      %v1787 = vsel %vm1778, %v1750, %v917
      %v1788 = vsel %vm1778, %v1751, %v919
      %v1789 = vsel %vm1778, %v1752, %v921
      %v1790 = vsel %vm1778, %v1753, %v923
      %v1791 = vsel %vm1778, %v1754, %v925
      %v1792 = vsel %vm1778, %v1755, %v927
      %v1793 = vsel %vm1778, %v1756, %v929
      %v1794 = vsel %vm1778, %v1757, %v931
      %v1795 = vsel %vm1778, %v1758, %v933
      %v1796 = vsel %vm1778, %v1759, %v935
      %v1797 = vsel %vm1778, %v1760, %v937
      %v1798 = vsel %vm1778, %v1761, %v939
      %v1799 = vsel %vm1778, %v1762, %v941
      %v1800 = vsel %vm1778, %v1763, %v943
      %v1801 = vsel %vm1778, %v1764, %v945
      %v1802 = vsel %vm1778, %v1765, %v947
      %v1803 = vsel %vm1778, %v1766, %v949
      %v1804 = vsel %vm1778, %v1767, %v951
      %v1805 = vsel %vm1778, %v1768, %v953
      %v1806 = vsel %vm1778, %v1769, %v955
      %v1807 = vsel %vm1778, %v1770, %v957
      %v1808 = vsel %vm1778, %v1771, %v959
      %v1809 = vsel %vm1778, %v1772, %v961
      %v1810 = vsel %vm1778, %v1773, %v963
      %v1811 = vsel %vm1778, %v1774, %v965
      %v1812 = vsel %vm1778, %v1775, %v967
      %v1813 = vsel %vm1778, %v1776, %v969
      %v1814 = vsel %vm1778, %v1777, %v971
      %vm1815 = vcmask 162816
      %v1816 = vsel %vm1815, %v1779, %v1082
      %v1817 = vsel %vm1815, %v1780, %v1084
      %v1818 = vsel %vm1815, %v1781, %v1086
      %v1819 = vsel %vm1815, %v1782, %v1088
      %v1820 = vsel %vm1815, %v1783, %v1090
      %v1821 = vsel %vm1815, %v1784, %v1092
      %v1822 = vsel %vm1815, %v1785, %v1094
      %v1823 = vsel %vm1815, %v1786, %v1096
      %v1824 = vsel %vm1815, %v1787, %v1098
      %v1825 = vsel %vm1815, %v1788, %v1100
      %v1826 = vsel %vm1815, %v1789, %v1102
      %v1827 = vsel %vm1815, %v1790, %v1104
      %v1828 = vsel %vm1815, %v1791, %v1106
      %v1829 = vsel %vm1815, %v1792, %v1108
      %v1830 = vsel %vm1815, %v1793, %v1110
      %v1831 = vsel %vm1815, %v1794, %v1112
      %v1832 = vsel %vm1815, %v1795, %v1114
      %v1833 = vsel %vm1815, %v1796, %v1116
      %v1834 = vsel %vm1815, %v1797, %v1118
      %v1835 = vsel %vm1815, %v1798, %v1120
      %v1836 = vsel %vm1815, %v1799, %v1122
      %v1837 = vsel %vm1815, %v1800, %v1124
      %v1838 = vsel %vm1815, %v1801, %v1126
      %v1839 = vsel %vm1815, %v1802, %v1128
      %v1840 = vsel %vm1815, %v1803, %v1130
      %v1841 = vsel %vm1815, %v1804, %v1132
      %v1842 = vsel %vm1815, %v1805, %v1134
      %v1843 = vsel %vm1815, %v1806, %v1136
      %v1844 = vsel %vm1815, %v1807, %v1138
      %v1845 = vsel %vm1815, %v1808, %v1140
      %v1846 = vsel %vm1815, %v1809, %v1142
      %v1847 = vsel %vm1815, %v1810, %v1144
      %v1848 = vsel %vm1815, %v1811, %v1146
      %v1849 = vsel %vm1815, %v1812, %v1148
      %v1850 = vsel %vm1815, %v1813, %v1150
      %v1851 = vsel %vm1815, %v1814, %v1152
      %vm1852 = vcmask 195584
      %v1853 = vsel %vm1852, %v1816, %v1196
      %v1854 = vsel %vm1852, %v1817, %v1198
      %v1855 = vsel %vm1852, %v1818, %v1200
      %v1856 = vsel %vm1852, %v1819, %v1202
      %v1857 = vsel %vm1852, %v1820, %v1204
      %v1858 = vsel %vm1852, %v1821, %v1206
      %v1859 = vsel %vm1852, %v1822, %v1208
      %v1860 = vsel %vm1852, %v1823, %v1210
      %v1861 = vsel %vm1852, %v1824, %v1212
      %v1862 = vsel %vm1852, %v1825, %v1214
      %v1863 = vsel %vm1852, %v1826, %v1216
      %v1864 = vsel %vm1852, %v1827, %v1218
      %v1865 = vsel %vm1852, %v1828, %v1220
      %v1866 = vsel %vm1852, %v1829, %v1222
      %v1867 = vsel %vm1852, %v1830, %v1224
      %v1868 = vsel %vm1852, %v1831, %v1226
      %v1869 = vsel %vm1852, %v1832, %v1228
      %v1870 = vsel %vm1852, %v1833, %v1230
      %v1871 = vsel %vm1852, %v1834, %v1232
      %v1872 = vsel %vm1852, %v1835, %v1234
      %v1873 = vsel %vm1852, %v1836, %v1236
      %v1874 = vsel %vm1852, %v1837, %v1238
      %v1875 = vsel %vm1852, %v1838, %v1240
      %v1876 = vsel %vm1852, %v1839, %v1242
      %v1877 = vsel %vm1852, %v1840, %v1244
      %v1878 = vsel %vm1852, %v1841, %v1246
      %v1879 = vsel %vm1852, %v1842, %v1248
      %v1880 = vsel %vm1852, %v1843, %v1250
      %v1881 = vsel %vm1852, %v1844, %v1252
      %v1882 = vsel %vm1852, %v1845, %v1254
      %v1883 = vsel %vm1852, %v1846, %v1256
      %v1884 = vsel %vm1852, %v1847, %v1258
      %v1885 = vsel %vm1852, %v1848, %v1260
      %v1886 = vsel %vm1852, %v1849, %v1262
      %v1887 = vsel %vm1852, %v1850, %v1264
      %v1888 = vsel %vm1852, %v1851, %v1266
      %vm1889 = vcmask 228352
      %v1890 = vsel %vm1889, %v1853, %v1378
      %v1891 = vsel %vm1889, %v1854, %v1380
      %v1892 = vsel %vm1889, %v1855, %v1382
      %v1893 = vsel %vm1889, %v1856, %v1384
      %v1894 = vsel %vm1889, %v1857, %v1386
      %v1895 = vsel %vm1889, %v1858, %v1388
      %v1896 = vsel %vm1889, %v1859, %v1390
      %v1897 = vsel %vm1889, %v1860, %v1392
      %v1898 = vsel %vm1889, %v1861, %v1394
      %v1899 = vsel %vm1889, %v1862, %v1396
      %v1900 = vsel %vm1889, %v1863, %v1398
      %v1901 = vsel %vm1889, %v1864, %v1400
      %v1902 = vsel %vm1889, %v1865, %v1402
      %v1903 = vsel %vm1889, %v1866, %v1404
      %v1904 = vsel %vm1889, %v1867, %v1406
      %v1905 = vsel %vm1889, %v1868, %v1408
      %v1906 = vsel %vm1889, %v1869, %v1410
      %v1907 = vsel %vm1889, %v1870, %v1412
      %v1908 = vsel %vm1889, %v1871, %v1414
      %v1909 = vsel %vm1889, %v1872, %v1416
      %v1910 = vsel %vm1889, %v1873, %v1418
      %v1911 = vsel %vm1889, %v1874, %v1420
      %v1912 = vsel %vm1889, %v1875, %v1422
      %v1913 = vsel %vm1889, %v1876, %v1424
      %v1914 = vsel %vm1889, %v1877, %v1426
      %v1915 = vsel %vm1889, %v1878, %v1428
      %v1916 = vsel %vm1889, %v1879, %v1430
      %v1917 = vsel %vm1889, %v1880, %v1432
      %v1918 = vsel %vm1889, %v1881, %v1434
      %v1919 = vsel %vm1889, %v1882, %v1436
      %v1920 = vsel %vm1889, %v1883, %v1438
      %v1921 = vsel %vm1889, %v1884, %v1440
      %v1922 = vsel %vm1889, %v1885, %v1442
      %v1923 = vsel %vm1889, %v1886, %v1444
      %v1924 = vsel %vm1889, %v1887, %v1446
      %v1925 = vsel %vm1889, %v1888, %v1448
      %vm1926 = vcmask 261120
      %v1927 = vsel %vm1926, %v1890, %v1560
      %v1928 = vsel %vm1926, %v1891, %v1562
      %v1929 = vsel %vm1926, %v1892, %v1564
      %v1930 = vsel %vm1926, %v1893, %v1566
      %v1931 = vsel %vm1926, %v1894, %v1568
      %v1932 = vsel %vm1926, %v1895, %v1570
      %v1933 = vsel %vm1926, %v1896, %v1572
      %v1934 = vsel %vm1926, %v1897, %v1574
      %v1935 = vsel %vm1926, %v1898, %v1576
      %v1936 = vsel %vm1926, %v1899, %v1578
      %v1937 = vsel %vm1926, %v1900, %v1580
      %v1938 = vsel %vm1926, %v1901, %v1582
      %v1939 = vsel %vm1926, %v1902, %v1584
      %v1940 = vsel %vm1926, %v1903, %v1586
      %v1941 = vsel %vm1926, %v1904, %v1588
      %v1942 = vsel %vm1926, %v1905, %v1590
      %v1943 = vsel %vm1926, %v1906, %v1592
      %v1944 = vsel %vm1926, %v1907, %v1594
      %v1945 = vsel %vm1926, %v1908, %v1596
      %v1946 = vsel %vm1926, %v1909, %v1598
      %v1947 = vsel %vm1926, %v1910, %v1600
      %v1948 = vsel %vm1926, %v1911, %v1602
      %v1949 = vsel %vm1926, %v1912, %v1604
      %v1950 = vsel %vm1926, %v1913, %v1606
      %v1951 = vsel %vm1926, %v1914, %v1608
      %v1952 = vsel %vm1926, %v1915, %v1610
      %v1953 = vsel %vm1926, %v1916, %v1612
      %v1954 = vsel %vm1926, %v1917, %v1614
      %v1955 = vsel %vm1926, %v1918, %v1616
      %v1956 = vsel %vm1926, %v1919, %v1618
      %v1957 = vsel %vm1926, %v1920, %v1620
      %v1958 = vsel %vm1926, %v1921, %v1622
      %v1959 = vsel %vm1926, %v1922, %v1624
      %v1960 = vsel %vm1926, %v1923, %v1626
      %v1961 = vsel %vm1926, %v1924, %v1628
      %v1962 = vsel %vm1926, %v1925, %v1630
      %v1963 = vld [vmem:[%s2] sm:$0xff]
      %v1964 = vld [vmem:[%s2 + $0x8] sm:$0xff]
      %v1965 = vld [vmem:[%s2 + $0x10] sm:$0xff]
      %v1966 = vld [vmem:[%s2 + $0x18] sm:$0xff]
      %v1967 = vld [vmem:[%s2 + $0x20] sm:$0xf]
      %v1968 = vld [vmem:[%s3] sm:$0x1]
      %v1970 = vlaneseq
      %v1971 = vshrl.u32 %v1970, 7
      %v1972 = vsub.s32 0, %v1971
      %v1973 = vrot.slane %v1968, %v1972
      %vm1975 = vcmask 293888
      %v1977 = vsel %vm1975, %v1927, 0
      %v1980 = vsel %vm1975, %v1928, 0
      %v1983 = vsel %vm1975, %v1929, 0
      %v1986 = vsel %vm1975, %v1930, 0
      %v1989 = vsel %vm1975, %v1931, 0
      %v1992 = vsel %vm1975, %v1932, 0
      %v1995 = vsel %vm1975, %v1933, 0
      %v1998 = vsel %vm1975, %v1934, 0
      %v2001 = vsel %vm1975, %v1935, 0
      %v2004 = vsel %vm1975, %v1936, 0
      %v2007 = vsel %vm1975, %v1937, 0
      %v2010 = vsel %vm1975, %v1938, 0
      %v2013 = vsel %vm1975, %v1939, 0
      %v2016 = vsel %vm1975, %v1940, 0
      %v2019 = vsel %vm1975, %v1941, 0
      %v2022 = vsel %vm1975, %v1942, 0
      %v2025 = vsel %vm1975, %v1943, 0
      %v2028 = vsel %vm1975, %v1944, 0
      %v2031 = vsel %vm1975, %v1945, 0
      %v2034 = vsel %vm1975, %v1946, 0
      %v2037 = vsel %vm1975, %v1947, 0
      %v2040 = vsel %vm1975, %v1948, 0
      %v2043 = vsel %vm1975, %v1949, 0
      %v2046 = vsel %vm1975, %v1950, 0
      %v2049 = vsel %vm1975, %v1951, 0
      %v2052 = vsel %vm1975, %v1952, 0
      %v2055 = vsel %vm1975, %v1953, 0
      %v2058 = vsel %vm1975, %v1954, 0
      %v2061 = vsel %vm1975, %v1955, 0
      %v2064 = vsel %vm1975, %v1956, 0
      %v2067 = vsel %vm1975, %v1957, 0
      %v2070 = vsel %vm1975, %v1958, 0
      %v2073 = vsel %vm1975, %v1959, 0
      %v2076 = vsel %vm1975, %v1960, 0
      %v2079 = vsel %vm1975, %v1961, 0
      %v2082 = vsel %vm1975, %v1962, 0
      %v2085 = vsel %vm309, %v1967, 0
      %2087 = vmatprep.subr.mxu0 0.0
      %2088 = vmatpush1.msra.mxu0 %v1963
      %2089 = vmatprep.subr.mxu0 0.0
      %2090 = vmatpush1.msra.mxu0 %v1964
      %2091 = vmatprep.subr.mxu0 0.0
      %2092 = vmatpush1.msra.mxu0 %v1965
      %2093 = vmatprep.subr.mxu0 0.0
      %2094 = vmatpush1.msra.mxu0 %v1966
      %2095 = vmatprep.subr.mxu0 0.0
      %2096 = vmatpush1.msra.mxu0 %v2085
      %2097 = vmatprep.subr.mxu0 0.0
      %2098 = vmatpush1.msra.mxu0 0.0
      %2099 = vmatprep.subr.mxu0 0.0
      %2100 = vmatpush1.msra.mxu0 0.0
      %2101 = vmatprep.subr.mxu0 0.0
      %2102 = vmatpush1.msra.mxu0 0.0
      %2103 = vmatprep.subr.mxu0 0.0
      %2104 = vmatpush1.msra.mxu0 0.0
      %2105 = vmatprep.subr.mxu0 0.0
      %2106 = vmatpush1.msra.mxu0 0.0
      %2107 = vmatprep.subr.mxu0 0.0
      %2108 = vmatpush1.msra.mxu0 0.0
      %2109 = vmatprep.subr.mxu0 0.0
      %2110 = vmatpush1.msra.mxu0 0.0
      %2111 = vmatprep.subr.mxu0 0.0
      %2112 = vmatpush1.msra.mxu0 0.0
      %2113 = vmatprep.subr.mxu0 0.0
      %2114 = vmatpush1.msra.mxu0 0.0
      %2115 = vmatprep.subr.mxu0 0.0
      %2116 = vmatpush1.msra.mxu0 0.0
      %2117 = vmatprep.subr.mxu0 0.0
      %2118 = vmatpush1.msra.mxu0 0.0
      %2119 = vmatprep.subr.mxu0 0.0
      %2120 = vmatpush1.msra.mxu0 0.0
      %2121 = vmatprep.subr.mxu0 0.0
      %2122 = vmatpush1.msra.mxu0 0.0
      %2123 = vmatprep.subr.mxu0 0.0
      %2124 = vmatpush1.msra.mxu0 0.0
      %2125 = vmatprep.subr.mxu0 0.0
      %2126 = vmatpush1.msra.mxu0 0.0
      %2127 = vmatprep.subr.mxu0 0.0
      %2128 = vmatpush1.msra.mxu0 0.0
      %2129 = vmatprep.subr.mxu0 0.0
      %2130 = vmatpush1.msra.mxu0 0.0
      %2131 = vmatprep.subr.mxu0 0.0
      %2132 = vmatpush1.msra.mxu0 0.0
      %2133 = vmatprep.subr.mxu0 0.0
      %2134 = vmatpush1.msra.mxu0 0.0
      %2135 = vmatprep.subr.mxu0 0.0
      %2136 = vmatpush1.msra.mxu0 0.0
      %2137 = vmatprep.subr.mxu0 0.0
      %2138 = vmatpush1.msra.mxu0 0.0
      %2139 = vmatprep.subr.mxu0 0.0
      %2140 = vmatpush1.msra.mxu0 0.0
      %2141 = vmatprep.subr.mxu0 0.0
      %2142 = vmatpush1.msra.mxu0 0.0
      %2143 = vmatprep.subr.mxu0 0.0
      %2144 = vmatpush1.msra.mxu0 0.0
      %2145 = vmatprep.subr.mxu0 0.0
      %2146 = vmatpush1.msra.mxu0 0.0
      %2147 = vmatprep.subr.mxu0 0.0
      %2148 = vmatpush1.msra.mxu0 0.0
      %2149 = vmatprep.subr.mxu0 0.0
      %2150 = vmatpush1.msra.mxu0 0.0
      %2151 = vmatprep.mubr.f32.mxu0 0.0
      %2152 = vmatmul.mubr.f32.gmra.mrb[0].mxu0 %v1977
      %v2153 = vpop.f32.mrb[0].mxu0
      %v2154 = vadd.f32 %v1973, %v2153
      %v2155 = vpop.f32.mrb[0].mxu0
      %2156 = vmatprep.mubr.f32.mxu0 0.0
      %2157 = vmatmul.mubr.f32.gmra.mrb[0].mxu0 %v1980
      %v2158 = vpop.f32.mrb[0].mxu0
      %v2159 = vadd.f32 %v1973, %v2158
      %v2160 = vpop.f32.mrb[0].mxu0
      %2161 = vmatprep.mubr.f32.mxu0 0.0
      %2162 = vmatmul.mubr.f32.gmra.mrb[0].mxu0 %v1983
      %v2163 = vpop.f32.mrb[0].mxu0
      %v2164 = vadd.f32 %v1973, %v2163
      %v2165 = vpop.f32.mrb[0].mxu0
      %2166 = vmatprep.mubr.f32.mxu0 0.0
      %2167 = vmatmul.mubr.f32.gmra.mrb[0].mxu0 %v1986
      %v2168 = vpop.f32.mrb[0].mxu0
      %v2169 = vadd.f32 %v1973, %v2168
      %v2170 = vpop.f32.mrb[0].mxu0
      %2171 = vmatprep.mubr.f32.mxu0 0.0
      %2172 = vmatmul.mubr.f32.gmra.mrb[0].mxu0 %v1989
      %v2173 = vpop.f32.mrb[0].mxu0
      %v2174 = vadd.f32 %v1973, %v2173
      %v2175 = vpop.f32.mrb[0].mxu0
      %2176 = vmatprep.mubr.f32.mxu0 0.0
      %2177 = vmatmul.mubr.f32.gmra.mrb[0].mxu0 %v1992
      %v2178 = vpop.f32.mrb[0].mxu0
      %v2179 = vadd.f32 %v1973, %v2178
      %v2180 = vpop.f32.mrb[0].mxu0
      %2181 = vmatprep.mubr.f32.mxu0 0.0
      %2182 = vmatmul.mubr.f32.gmra.mrb[0].mxu0 %v1995
      %v2183 = vpop.f32.mrb[0].mxu0
      %v2184 = vadd.f32 %v1973, %v2183
      %v2185 = vpop.f32.mrb[0].mxu0
      %2186 = vmatprep.mubr.f32.mxu0 0.0
      %2187 = vmatmul.mubr.f32.gmra.mrb[0].mxu0 %v1998
      %v2188 = vpop.f32.mrb[0].mxu0
      %v2189 = vadd.f32 %v1973, %v2188
      %v2190 = vpop.f32.mrb[0].mxu0
      %2191 = vmatprep.mubr.f32.mxu0 0.0
      %2192 = vmatmul.mubr.f32.gmra.mrb[0].mxu0 %v2001
      %v2193 = vpop.f32.mrb[0].mxu0
      %v2194 = vadd.f32 %v1973, %v2193
      %v2195 = vpop.f32.mrb[0].mxu0
      %2196 = vmatprep.mubr.f32.mxu0 0.0
      %2197 = vmatmul.mubr.f32.gmra.mrb[0].mxu0 %v2004
      %v2198 = vpop.f32.mrb[0].mxu0
      %v2199 = vadd.f32 %v1973, %v2198
      %v2200 = vpop.f32.mrb[0].mxu0
      %2201 = vmatprep.mubr.f32.mxu0 0.0
      %2202 = vmatmul.mubr.f32.gmra.mrb[0].mxu0 %v2007
      %v2203 = vpop.f32.mrb[0].mxu0
      %v2204 = vadd.f32 %v1973, %v2203
      %v2205 = vpop.f32.mrb[0].mxu0
      %2206 = vmatprep.mubr.f32.mxu0 0.0
      %2207 = vmatmul.mubr.f32.gmra.mrb[0].mxu0 %v2010
      %v2208 = vpop.f32.mrb[0].mxu0
      %v2209 = vadd.f32 %v1973, %v2208
      %v2210 = vpop.f32.mrb[0].mxu0
      %2211 = vmatprep.mubr.f32.mxu0 0.0
      %2212 = vmatmul.mubr.f32.gmra.mrb[0].mxu0 %v2013
      %v2213 = vpop.f32.mrb[0].mxu0
      %v2214 = vadd.f32 %v1973, %v2213
      %v2215 = vpop.f32.mrb[0].mxu0
      %2216 = vmatprep.mubr.f32.mxu0 0.0
      %2217 = vmatmul.mubr.f32.gmra.mrb[0].mxu0 %v2016
      %v2218 = vpop.f32.mrb[0].mxu0
      %v2219 = vadd.f32 %v1973, %v2218
      %v2220 = vpop.f32.mrb[0].mxu0
      %2221 = vmatprep.mubr.f32.mxu0 0.0
      %2222 = vmatmul.mubr.f32.gmra.mrb[0].mxu0 %v2019
      %v2223 = vpop.f32.mrb[0].mxu0
      %v2224 = vadd.f32 %v1973, %v2223
      %v2225 = vpop.f32.mrb[0].mxu0
      %2226 = vmatprep.mubr.f32.mxu0 0.0
      %2227 = vmatmul.mubr.f32.gmra.mrb[0].mxu0 %v2022
      %v2228 = vpop.f32.mrb[0].mxu0
      %v2229 = vadd.f32 %v1973, %v2228
      %v2230 = vpop.f32.mrb[0].mxu0
      %2231 = vmatprep.mubr.f32.mxu0 0.0
      %2232 = vmatmul.mubr.f32.gmra.mrb[0].mxu0 %v2025
      %v2233 = vpop.f32.mrb[0].mxu0
      %v2234 = vadd.f32 %v1973, %v2233
      %v2235 = vpop.f32.mrb[0].mxu0
      %2236 = vmatprep.mubr.f32.mxu0 0.0
      %2237 = vmatmul.mubr.f32.gmra.mrb[0].mxu0 %v2028
      %v2238 = vpop.f32.mrb[0].mxu0
      %v2239 = vadd.f32 %v1973, %v2238
      %v2240 = vpop.f32.mrb[0].mxu0
      %2241 = vmatprep.mubr.f32.mxu0 0.0
      %2242 = vmatmul.mubr.f32.gmra.mrb[0].mxu0 %v2031
      %v2243 = vpop.f32.mrb[0].mxu0
      %v2244 = vadd.f32 %v1973, %v2243
      %v2245 = vpop.f32.mrb[0].mxu0
      %2246 = vmatprep.mubr.f32.mxu0 0.0
      %2247 = vmatmul.mubr.f32.gmra.mrb[0].mxu0 %v2034
      %v2248 = vpop.f32.mrb[0].mxu0
      %v2249 = vadd.f32 %v1973, %v2248
      %v2250 = vpop.f32.mrb[0].mxu0
      %2251 = vmatprep.mubr.f32.mxu0 0.0
      %2252 = vmatmul.mubr.f32.gmra.mrb[0].mxu0 %v2037
      %v2253 = vpop.f32.mrb[0].mxu0
      %v2254 = vadd.f32 %v1973, %v2253
      %v2255 = vpop.f32.mrb[0].mxu0
      %2256 = vmatprep.mubr.f32.mxu0 0.0
      %2257 = vmatmul.mubr.f32.gmra.mrb[0].mxu0 %v2040
      %v2258 = vpop.f32.mrb[0].mxu0
      %v2259 = vadd.f32 %v1973, %v2258
      %v2260 = vpop.f32.mrb[0].mxu0
      %2261 = vmatprep.mubr.f32.mxu0 0.0
      %2262 = vmatmul.mubr.f32.gmra.mrb[0].mxu0 %v2043
      %v2263 = vpop.f32.mrb[0].mxu0
      %v2264 = vadd.f32 %v1973, %v2263
      %v2265 = vpop.f32.mrb[0].mxu0
      %2266 = vmatprep.mubr.f32.mxu0 0.0
      %2267 = vmatmul.mubr.f32.gmra.mrb[0].mxu0 %v2046
      %v2268 = vpop.f32.mrb[0].mxu0
      %v2269 = vadd.f32 %v1973, %v2268
      %v2270 = vpop.f32.mrb[0].mxu0
      %2271 = vmatprep.mubr.f32.mxu0 0.0
      %2272 = vmatmul.mubr.f32.gmra.mrb[0].mxu0 %v2049
      %v2273 = vpop.f32.mrb[0].mxu0
      %v2274 = vadd.f32 %v1973, %v2273
      %v2275 = vpop.f32.mrb[0].mxu0
      %2276 = vmatprep.mubr.f32.mxu0 0.0
      %2277 = vmatmul.mubr.f32.gmra.mrb[0].mxu0 %v2052
      %v2278 = vpop.f32.mrb[0].mxu0
      %v2279 = vadd.f32 %v1973, %v2278
      %v2280 = vpop.f32.mrb[0].mxu0
      %2281 = vmatprep.mubr.f32.mxu0 0.0
      %2282 = vmatmul.mubr.f32.gmra.mrb[0].mxu0 %v2055
      %v2283 = vpop.f32.mrb[0].mxu0
      %v2284 = vadd.f32 %v1973, %v2283
      %v2285 = vpop.f32.mrb[0].mxu0
      %2286 = vmatprep.mubr.f32.mxu0 0.0
      %2287 = vmatmul.mubr.f32.gmra.mrb[0].mxu0 %v2058
      %v2288 = vpop.f32.mrb[0].mxu0
      %v2289 = vadd.f32 %v1973, %v2288
      %v2290 = vpop.f32.mrb[0].mxu0
      %2291 = vmatprep.mubr.f32.mxu0 0.0
      %2292 = vmatmul.mubr.f32.gmra.mrb[0].mxu0 %v2061
      %v2293 = vpop.f32.mrb[0].mxu0
      %v2294 = vadd.f32 %v1973, %v2293
      %v2295 = vpop.f32.mrb[0].mxu0
      %2296 = vmatprep.mubr.f32.mxu0 0.0
      %2297 = vmatmul.mubr.f32.gmra.mrb[0].mxu0 %v2064
      %v2298 = vpop.f32.mrb[0].mxu0
      %v2299 = vadd.f32 %v1973, %v2298
      %v2300 = vpop.f32.mrb[0].mxu0
      %2301 = vmatprep.mubr.f32.mxu0 0.0
      %2302 = vmatmul.mubr.f32.gmra.mrb[0].mxu0 %v2067
      %v2303 = vpop.f32.mrb[0].mxu0
      %v2304 = vadd.f32 %v1973, %v2303
      %v2305 = vpop.f32.mrb[0].mxu0
      %2306 = vmatprep.mubr.f32.mxu0 0.0
      %2307 = vmatmul.mubr.f32.gmra.mrb[0].mxu0 %v2070
      %v2308 = vpop.f32.mrb[0].mxu0
      %v2309 = vadd.f32 %v1973, %v2308
      %v2310 = vpop.f32.mrb[0].mxu0
      %2311 = vmatprep.mubr.f32.mxu0 0.0
      %2312 = vmatmul.mubr.f32.gmra.mrb[0].mxu0 %v2073
      %v2313 = vpop.f32.mrb[0].mxu0
      %v2314 = vadd.f32 %v1973, %v2313
      %v2315 = vpop.f32.mrb[0].mxu0
      %2316 = vmatprep.mubr.f32.mxu0 0.0
      %2317 = vmatmul.mubr.f32.gmra.mrb[0].mxu0 %v2076
      %v2318 = vpop.f32.mrb[0].mxu0
      %v2319 = vadd.f32 %v1973, %v2318
      %v2320 = vpop.f32.mrb[0].mxu0
      %2321 = vmatprep.mubr.f32.mxu0 0.0
      %2322 = vmatmul.mubr.f32.gmra.mrb[0].mxu0 %v2079
      %v2323 = vpop.f32.mrb[0].mxu0
      %v2324 = vadd.f32 %v1973, %v2323
      %v2325 = vpop.f32.mrb[0].mxu0
      %2326 = vmatprep.mubr.f32.mxu0 0.0
      %2327 = vmatmul.mubr.f32.gmra.mrb[0].mxu0 %v2082
      %v2328 = vpop.f32.mrb[0].mxu0
      %v2329 = vadd.f32 %v1973, %v2328
      %v2330 = vpop.f32.mrb[0].mxu0
      %2331 = vdwg.mxu0
      %v2332 = vmax.f32 %v2154, 0.0
      %v2333 = vmax.f32 %v2159, 0.0
      %v2334 = vmax.f32 %v2164, 0.0
      %v2335 = vmax.f32 %v2169, 0.0
      %v2336 = vmax.f32 %v2174, 0.0
      %v2337 = vmax.f32 %v2179, 0.0
      %v2338 = vmax.f32 %v2184, 0.0
      %v2339 = vmax.f32 %v2189, 0.0
      %v2340 = vmax.f32 %v2194, 0.0
      %v2341 = vmax.f32 %v2199, 0.0
      %v2342 = vmax.f32 %v2204, 0.0
      %v2343 = vmax.f32 %v2209, 0.0
      %v2344 = vmax.f32 %v2214, 0.0
      %v2345 = vmax.f32 %v2219, 0.0
      %v2346 = vmax.f32 %v2224, 0.0
      %v2347 = vmax.f32 %v2229, 0.0
      %v2348 = vmax.f32 %v2234, 0.0
      %v2349 = vmax.f32 %v2239, 0.0
      %v2350 = vmax.f32 %v2244, 0.0
      %v2351 = vmax.f32 %v2249, 0.0
      %v2352 = vmax.f32 %v2254, 0.0
      %v2353 = vmax.f32 %v2259, 0.0
      %v2354 = vmax.f32 %v2264, 0.0
      %v2355 = vmax.f32 %v2269, 0.0
      %v2356 = vmax.f32 %v2274, 0.0
      %v2357 = vmax.f32 %v2279, 0.0
      %v2358 = vmax.f32 %v2284, 0.0
      %v2359 = vmax.f32 %v2289, 0.0
      %v2360 = vmax.f32 %v2294, 0.0
      %v2361 = vmax.f32 %v2299, 0.0
      %v2362 = vmax.f32 %v2304, 0.0
      %v2363 = vmax.f32 %v2309, 0.0
      %v2364 = vmax.f32 %v2314, 0.0
      %v2365 = vmax.f32 %v2319, 0.0
      %v2366 = vmax.f32 %v2324, 0.0
      %v2367 = vmax.f32 %v2329, 0.0
      %2368 = vst.msk [vmem:[%s267] sm:$0xff] %vm1704, %v2332
      %2369 = vst.msk [vmem:[%s267 + $0x8] sm:$0xff] %vm1704, %v2333
      %2370 = vst.msk [vmem:[%s267 + $0x10] sm:$0xff] %vm1704, %v2334
      %2371 = vst.msk [vmem:[%s267 + $0x18] sm:$0xff] %vm1704, %v2335
      %2372 = vst.msk [vmem:[%s267 + $0x20] sm:$0xff] %vm1704, %v2336
      %2373 = vst.msk [vmem:[%s267 + $0x28] sm:$0xff] %vm1704, %v2337
      %2374 = vst.msk [vmem:[%s267 + $0x30] sm:$0xff] %vm1704, %v2338
      %2375 = vst.msk [vmem:[%s267 + $0x38] sm:$0xff] %vm1704, %v2339
      %2376 = vst.msk [vmem:[%s267 + $0x40] sm:$0xff] %vm1704, %v2340
      %2377 = vst.msk [vmem:[%s267 + $0x48] sm:$0xff] %vm1704, %v2341
      %2378 = vst.msk [vmem:[%s267 + $0x50] sm:$0xff] %vm1704, %v2342
      %2379 = vst.msk [vmem:[%s267 + $0x58] sm:$0xff] %vm1704, %v2343
      %2380 = vst.msk [vmem:[%s267 + $0x60] sm:$0xff] %vm1704, %v2344
      %2381 = vst.msk [vmem:[%s267 + $0x68] sm:$0xff] %vm1704, %v2345
      %2382 = vst.msk [vmem:[%s267 + $0x70] sm:$0xff] %vm1704, %v2346
      %2383 = vst.msk [vmem:[%s267 + $0x78] sm:$0xff] %vm1704, %v2347
      %2384 = vst.msk [vmem:[%s267 + $0x80] sm:$0xff] %vm1704, %v2348
      %2385 = vst.msk [vmem:[%s267 + $0x88] sm:$0xff] %vm1704, %v2349
      %2386 = vst.msk [vmem:[%s267 + $0x90] sm:$0xff] %vm1704, %v2350
      %2387 = vst.msk [vmem:[%s267 + $0x98] sm:$0xff] %vm1704, %v2351
      %2388 = vst.msk [vmem:[%s267 + $0xa0] sm:$0xff] %vm1704, %v2352
      %2389 = vst.msk [vmem:[%s267 + $0xa8] sm:$0xff] %vm1704, %v2353
      %2390 = vst.msk [vmem:[%s267 + $0xb0] sm:$0xff] %vm1704, %v2354
      %2391 = vst.msk [vmem:[%s267 + $0xb8] sm:$0xff] %vm1704, %v2355
      %2392 = vst.msk [vmem:[%s267 + $0xc0] sm:$0xff] %vm1704, %v2356
      %2393 = vst.msk [vmem:[%s267 + $0xc8] sm:$0xff] %vm1704, %v2357
      %2394 = vst.msk [vmem:[%s267 + $0xd0] sm:$0xff] %vm1704, %v2358
      %2395 = vst.msk [vmem:[%s267 + $0xd8] sm:$0xff] %vm1704, %v2359
      %2396 = vst.msk [vmem:[%s267 + $0xe0] sm:$0xff] %vm1704, %v2360
      %2397 = vst.msk [vmem:[%s267 + $0xe8] sm:$0xff] %vm1704, %v2361
      %2398 = vst.msk [vmem:[%s267 + $0xf0] sm:$0xff] %vm1704, %v2362
      %2399 = vst.msk [vmem:[%s267 + $0xf8] sm:$0xff] %vm1704, %v2363
      %2400 = vst.msk [vmem:[%s267 + $0x100] sm:$0xff] %vm1704, %v2364
      %2401 = vst.msk [vmem:[%s267 + $0x108] sm:$0xff] %vm1704, %v2365
      %2402 = vst.msk [vmem:[%s267 + $0x110] sm:$0xff] %vm1704, %v2366
      %2403 = vst.msk [vmem:[%s267 + $0x118] sm:$0xff] %vm1704, %v2367
      %p2404 = scmp.lt.s32.totalorder %s19, 1
      %s2405 = scalar_select %p2404, %s19, 1
      %p2406 = scmp.lt.s32.totalorder %s20, 0
      %s2407 = scalar_select %p2406, %s20, 0
      %s2408 = smul.addr %s2407, 36
      %s2409 = smul.addr %s2405, 36
      %s2410 = sadd.s32 %s2408, %s2409
      %s2411 = smul.addr %s2410, 8
      %s2412 = scalar_lea.vmem %s4, %s2411
      // Predicated region
      $region37: #{tpu_custom_call.1} parent=35 // pred_check
        %p2413 = pneg %p145
      $region38: #{tpu_custom_call.1} parent=35 // pred_check_branch
        %2415 = sbr.rel (%p2413) target = $region40
      $region39: #{tpu_custom_call.1} parent=35 // pred_region
        _
      $region40: #{tpu_custom_call.1} parent=35 // pred_fallthru
        _
    $region36: #{tpu_custom_call.1} parent=5 // pred_fallthru
      _
    %p2416 = scmp.le.s32.totalorder 2, %s10
    // Predicated region
    $region41: #{tpu_custom_call.1} parent=5 // pred_check
      %p2417 = pneg %p2416
    $region42: #{tpu_custom_call.1} parent=5 // pred_check_branch
      %2419 = sbr.rel (%p2417) target = $region44
    $region43: #{tpu_custom_call.1} parent=5 // pred_region
      %s2420 = ssub.s32 %s10, 2
      // Predicated region
      $region45: #{tpu_custom_call.1} parent=43 // pred_check
        %p2421 = pneg %p151
      $region46: #{tpu_custom_call.1} parent=43 // pred_check_branch
        %2423 = sbr.rel (%p2421) target = $region48
      $region47: #{tpu_custom_call.1} parent=43 // pred_region
        %p2424 = scmp.lt.s32.totalorder %s21, 1
        %s2425 = scalar_select %p2424, %s21, 1
        %p2426 = scmp.lt.s32.totalorder %s22, 0
        %s2427 = scalar_select %p2426, %s22, 0
        %s2428 = smul.addr %s2427, 36
        %s2429 = smul.addr %s2425, 36
        %s2430 = sadd.s32 %s2428, %s2429
        %s2431 = smul.addr %s2430, 8
        %s2432 = scalar_lea.vmem %s4, %s2431
      $region48: #{tpu_custom_call.1} parent=43 // pred_fallthru
        _
    $region44: #{tpu_custom_call.1} parent=5 // pred_fallthru
      _
  $region6: #{tpu_custom_call.1} parent=0 // loop_footer
    %s14 = sadd.s32 1, %s10
  $region7: #{tpu_custom_call.1} parent=0 // loop_footer_branch
    %9 = sbr.rel target = $region3
  $region8: #{tpu_custom_call.1} parent=0 // loop_exit
    _

</llo_original>
